<compile_context>
chip_gen: v5e
topology: v5e:2x2
jax: 0.10.0
libtpu: 0.0.40
codegen_flags: <defaults>
</compile_context>

<pallas_src>
import jax
import jax.numpy as jnp
from jax import lax
from jax.experimental import pallas as pl
from jax.experimental.pallas import tpu as pltpu

# ----------------------------- model sizes ---------------------------------
NTOKEN = 64
NINP = 32
NHID = 32
NLAYERS = 2
SEQ_LEN = 8
BATCH = 8
NTOKEN_PAD = 128          # lane-dense decoder output width


# --------------------------- fused forward kernel ---------------------------
def _fused_rnn_kernel(tok_ref, g0_ref, b0_ref, wwave_ref, b1_ref,
                      decw_ref, decb_ref, h0_ref, c0_ref,
                      logp_ref, hn_ref, cn_ref,
                      gx_scr, y_scr):
    """Fused: one-hot embed+proj + 2-layer LSTM (unrolled over T) + decoder."""
    TB = tok_ref.shape[0]                 # T * B
    ntoken = g0_ref.shape[0]
    _, B, nh = h0_ref.shape
    T = TB // B

    # ---- embedding fused with layer-0 input projection ---------------------
    # onehot @ (enc @ W_ih0) == enc[tokens] @ W_ih0 ; single lane-dense matmul.
    tok = tok_ref[...]                                            # (TB, 1) int32
    lane_ids = lax.broadcasted_iota(jnp.int32, (TB, ntoken), 1)
    onehot = jnp.where(lane_ids == tok, jnp.float32(1.0), jnp.float32(0.0))
    gx_scr[...] = (jnp.dot(onehot, g0_ref[...],
                           preferred_element_type=jnp.float32)
                   + b0_ref[...])                                 # (TB, 4*nh)

    # Loop-invariant values: load / broadcast once (JAX does not CSE these).
    wwave = wwave_ref[...]                                        # (2*nh, 8*nh)
    b1 = jnp.broadcast_to(b1_ref[...], (B, 4 * nh))

    # g-gate lane selectors for the single-EUP-pass nonlinearity.
    col = lax.broadcasted_iota(jnp.int32, (B, 4 * nh), 1)
    g_mask = (col >= 2 * nh) & (col < 3 * nh)
    g_scale = jnp.where(g_mask, jnp.float32(2.0), jnp.float32(1.0))
    g_off = jnp.where(g_mask, jnp.float32(1.0), jnp.float32(0.0))

    def lstm_cell(gates, c):
        # One full-width sigmoid; tanh(x) = 2*sigmoid(2x) - 1 on g-gate lanes.
        sig = jax.nn.sigmoid(gates * g_scale)
        act = sig * g_scale - g_off
        i_g = act[:, 0 * nh:1 * nh]
        f_g = act[:, 1 * nh:2 * nh]
        g_g = act[:, 2 * nh:3 * nh]
        o_g = act[:, 3 * nh:4 * nh]
        c_new = f_g * c + i_g * g_g
        h_new = o_g * jnp.tanh(c_new)
        return h_new, c_new

    h0 = h0_ref[0]
    c0 = c0_ref[0]
    h1 = h0_ref[1]
    c1 = c0_ref[1]

    # Prologue: layer-0 h-contribution for step 0 (uses the W_hh0 block of the
    # stacked wavefront weight; rows 0:nh, cols 4*nh:8*nh).
    hc0 = jnp.dot(h0, wwave_ref[0:nh, 4 * nh:8 * nh],
                  preferred_element_type=jnp.float32)             # (B, 4*nh)

    # Fully unrolled static time loop; h/c carried in vregs across steps.
    # One wavefront matmul per step: produces layer-1 gates for step t AND
    # layer-0's h-contribution for step t+1.
    for t in range(T):
        gates0 = gx_scr[t * B:(t + 1) * B, :] + hc0
        h0, c0 = lstm_cell(gates0, c0)

        lhs = jnp.concatenate([h0, h1], axis=1)                   # (B, 2*nh)
        r = jnp.dot(lhs, wwave, preferred_element_type=jnp.float32)  # (B, 8*nh)
        gates1 = r[:, 0:4 * nh] + b1
        h1, c1 = lstm_cell(gates1, c1)
        hc0 = r[:, 4 * nh:8 * nh]                                  # for step t+1

        y_scr[t * B:(t + 1) * B, :] = h1          # VMEM-resident sequence output

    # Final hidden-state writeback: single store per layer at the very end.
    hn_ref[0] = h0
    hn_ref[1] = h1
    cn_ref[0] = c0
    cn_ref[1] = c1

    # ---- decoder + log_softmax over all T*B rows, lane-dense 128 wide -------
    # Padded decoder bias is -1e30 so pad columns never win the max / add to
    # the sum; the wrapper slices back to ntoken.
    y = y_scr[...]                                                # (TB, nh)
    logits = (jnp.dot(y, decw_ref[...], preferred_element_type=jnp.float32)
              + decb_ref[...])                                    # (TB, 128)
    m = jnp.max(logits, axis=-1, keepdims=True)
    shifted = logits - m
    lse = jnp.log(jnp.sum(jnp.exp(shifted), axis=-1, keepdims=True))
    logp_ref[...] = shifted - lse


# ------------------------ one-time weight precompute -------------------------
def prepare_params(params):
    """Weight-only precomputes (run once, outside the per-call hot path)."""
    hp = lax.Precision.HIGHEST
    lp0, lp1 = params["lstm"]
    # Fold the embedding table into layer-0's input projection.
    g0 = jnp.dot(params["encoder_weight"], lp0["w_ih_t"], precision=hp)
    # Wavefront weight: [[W_ih1, W_hh0], [W_hh1, 0]]  -> (2*nhid, 8*nhid).
    zeros = jnp.zeros_like(lp0["w_hh_t"])
    wwave = jnp.concatenate(
        [jnp.concatenate([lp1["w_ih_t"], lp0["w_hh_t"]], axis=1),
         jnp.concatenate([lp1["w_hh_t"], zeros], axis=1)],
        axis=0)
    # Lane-dense (128-wide) decoder weight/bias; pad bias = -1e30.
    decw_pad = jnp.zeros((NHID, NTOKEN_PAD), jnp.float32)
    decw_pad = decw_pad.at[:, :NTOKEN].set(params["decoder_weight_t"])
    decb_pad = jnp.full((1, NTOKEN_PAD), -1e30, jnp.float32)
    decb_pad = decb_pad.at[0, :NTOKEN].set(params["decoder_bias"][0])
    return {"g0": g0, "b0": lp0["b"], "wwave": wwave, "b1": lp1["b"],
            "decw_pad": decw_pad, "decb_pad": decb_pad}


# ------------------------------ full forward --------------------------------
@jax.jit
def rnn_model_forward(prepped, tokens, hidden):
    """Forward pass of RNNModel (LSTM variant), dropout = identity (eval)."""
    T, B = tokens.shape
    h0_all, c0_all = hidden                       # (nlayers, B, nhid) each

    logp_pad, h_n, c_n = pl.pallas_call(
        _fused_rnn_kernel,
        out_shape=(
            jax.ShapeDtypeStruct((T * B, NTOKEN_PAD), jnp.float32),
            jax.ShapeDtypeStruct((NLAYERS, B, NHID), jnp.float32),
            jax.ShapeDtypeStruct((NLAYERS, B, NHID), jnp.float32),
        ),
        scratch_shapes=[pltpu.VMEM((T * B, 4 * NHID), jnp.float32),  # gates_x0
                        pltpu.VMEM((T * B, NHID), jnp.float32)],     # layer-1 y
    )(tokens.reshape(T * B, 1),
      prepped["g0"], prepped["b0"], prepped["wwave"], prepped["b1"],
      prepped["decw_pad"], prepped["decb_pad"],
      h0_all, c0_all)
    return logp_pad[:, :NTOKEN], (h_n, c_n)


# -------------------------- pure-JAX reference -------------------------------
def rnn_model_forward_ref(params, tokens, hidden):
    """Straightforward JAX reference (same math as the PyTorch module, eval)."""
    h_all, c_all = hidden
    x = params["encoder_weight"][tokens]          # (T, B, ninp)
    h_fin, c_fin = [], []
    hp = lax.Precision.HIGHEST
    for layer in range(NLAYERS):
        lp = params["lstm"][layer]
        h, c = h_all[layer], c_all[layer]
        ys = []
        for t in range(x.shape[0]):
            gates = (jnp.dot(x[t], lp["w_ih_t"], precision=hp)
                     + jnp.dot(h, lp["w_hh_t"], precision=hp) + lp["b"][0])
            i = jax.nn.sigmoid(gates[:, 0 * NHID:1 * NHID])
            f = jax.nn.sigmoid(gates[:, 1 * NHID:2 * NHID])
            g = jnp.tanh(gates[:, 2 * NHID:3 * NHID])
            o = jax.nn.sigmoid(gates[:, 3 * NHID:4 * NHID])
            c = f * c + i * g
            h = o * jnp.tanh(c)
            ys.append(h)
        x = jnp.stack(ys, axis=0)
        h_fin.append(h)
        c_fin.append(c)
    out = x.reshape(-1, NHID)
    logits = jnp.dot(out, params["decoder_weight_t"], precision=hp) \
        + params["decoder_bias"]
    return (jax.nn.log_softmax(logits, axis=-1),
            (jnp.stack(h_fin, axis=0), jnp.stack(c_fin, axis=0)))


# --------------------------- deterministic init ------------------------------
def init_params(key):
    keys = jax.random.split(key, 2 + 4 * NLAYERS)
    initrange = 0.1
    params = {
        # nn.init.uniform_(encoder.weight, -0.1, 0.1)
        "encoder_weight": jax.random.uniform(
            keys[0], (NTOKEN, NINP), jnp.float32, -initrange, initrange),
        # nn.init.uniform_(decoder.weight, -0.1, 0.1); stored pre-transposed.
        "decoder_weight_t": jax.random.uniform(
            keys[1], (NTOKEN, NHID), jnp.float32, -initrange, initrange).T,
        # nn.init.zeros_(decoder.bias)
        "decoder_bias": jnp.zeros((1, NTOKEN), jnp.float32),
        "lstm": [],
    }
    stdv = 1.0 / (NHID ** 0.5)  # PyTorch LSTM default init range
    for layer in range(NLAYERS):
        in_feat = NINP if layer == 0 else NHID
        k = keys[2 + 4 * layer: 2 + 4 * (layer + 1)]
        w_ih = jax.random.uniform(k[0], (4 * NHID, in_feat), jnp.float32,
                                  -stdv, stdv)
        w_hh = jax.random.uniform(k[1], (4 * NHID, NHID), jnp.float32,
                                  -stdv, stdv)
        b_ih = jax.random.uniform(k[2], (4 * NHID,), jnp.float32, -stdv, stdv)
        b_hh = jax.random.uniform(k[3], (4 * NHID,), jnp.float32, -stdv, stdv)
        params["lstm"].append({
            "w_ih_t": w_ih.T,                       # (in_feat, 4*nhid)
            "w_hh_t": w_hh.T,                       # (nhid, 4*nhid)
            "b": (b_ih + b_hh).reshape(1, 4 * NHID),
        })
    return params


def init_hidden(bsz):
    return (jnp.zeros((NLAYERS, bsz, NHID), jnp.float32),
            jnp.zeros((NLAYERS, bsz, NHID), jnp.float32))


# ---------------------------------- main -------------------------------------
if __name__ == "__main__":
    key = jax.random.PRNGKey(0)
    pkey, tkey = jax.random.split(key)
    params = init_params(pkey)
    prepped = jax.tree_util.tree_map(jnp.asarray, prepare_params(params))

    tokens = jax.random.randint(tkey, (SEQ_LEN, BATCH), 0, NTOKEN,
                                dtype=jnp.int32)
    hidden = init_hidden(BATCH)

    log_probs, (h_n, c_n) = rnn_model_forward(prepped, tokens, hidden)
    jax.block_until_ready((log_probs, h_n, c_n))

    assert log_probs.shape == (SEQ_LEN * BATCH, NTOKEN)
    assert h_n.shape == (NLAYERS, BATCH, NHID)
    assert c_n.shape == (NLAYERS, BATCH, NHID)
    # log_softmax rows should sum to ~1 in prob space.
    row_sums = jnp.exp(log_probs).sum(axis=-1)
    assert jnp.allclose(row_sums, 1.0, atol=1e-4)

    # Cross-check the fused kernel against the plain-JAX reference.
    ref_lp, (ref_h, ref_c) = rnn_model_forward_ref(params, tokens, hidden)
    assert jnp.allclose(log_probs, ref_lp, atol=5e-3), \
        float(jnp.max(jnp.abs(log_probs - ref_lp)))
    assert jnp.allclose(h_n, ref_h, atol=5e-3)
    assert jnp.allclose(c_n, ref_c, atol=5e-3)

    print("KERNEL_OK")
</pallas_src>

<mosaic_0001>
module attributes {stable_mosaic.version = 11 : i64} {
  func.func @_fused_rnn_kernel(%arg0: memref<64x1xi32, #tpu.memory_space<vmem>>, %arg1: memref<64x128xf32, #tpu.memory_space<vmem>>, %arg2: memref<1x128xf32, #tpu.memory_space<vmem>>, %arg3: memref<64x256xf32, #tpu.memory_space<vmem>>, %arg4: memref<1x128xf32, #tpu.memory_space<vmem>>, %arg5: memref<32x128xf32, #tpu.memory_space<vmem>>, %arg6: memref<1x128xf32, #tpu.memory_space<vmem>>, %arg7: memref<2x8x32xf32, #tpu.memory_space<vmem>>, %arg8: memref<2x8x32xf32, #tpu.memory_space<vmem>>, %arg9: memref<64x128xf32, #tpu.memory_space<vmem>>, %arg10: memref<2x8x32xf32, #tpu.memory_space<vmem>>, %arg11: memref<2x8x32xf32, #tpu.memory_space<vmem>>, %arg12: memref<64x128xf32, #tpu.memory_space<vmem>>, %arg13: memref<64x32xf32, #tpu.memory_space<vmem>>) attributes {dimension_semantics = [], scalar_prefetch = 0 : i64, scratch_operands = 2 : i64, tpu.core_type = #tpu.core_type<tc>} {
    %c0 = arith.constant 0 : index
    %c0_0 = arith.constant 0 : index
    %0 = vector.load %arg0[%c0, %c0_0] : memref<64x1xi32, #tpu.memory_space<vmem>>, vector<64x1xi32>
    %1 = tpu.iota {dimensions = array<i32: 1>} : vector<64x64xi32>
    %2 = vector.broadcast %0 : vector<64x1xi32> to vector<64x64xi32>
    %3 = arith.cmpi eq, %1, %2 : vector<64x64xi32>
    %cst = arith.constant 1.000000e+00 : f32
    %cst_1 = arith.constant 0.000000e+00 : f32
    %4 = vector.broadcast %cst : f32 to vector<64x64xf32>
    %5 = vector.broadcast %cst_1 : f32 to vector<64x64xf32>
    %6 = arith.select %3, %4, %5 : vector<64x64xi1>, vector<64x64xf32>
    %c0_2 = arith.constant 0 : index
    %c0_3 = arith.constant 0 : index
    %7 = vector.load %arg1[%c0_2, %c0_3] : memref<64x128xf32, #tpu.memory_space<vmem>>, vector<64x128xf32>
    %cst_4 = arith.constant dense<0.000000e+00> : vector<64x128xf32>
    %8 = tpu.matmul %6, %7, %cst_4 {dimension_numbers = #tpu.dot_dimension_numbers<[1], [0], [0], [1], [0, 0, 1, 1], [], []>} : vector<64x64xf32>, vector<64x128xf32>, vector<64x128xf32> -> vector<64x128xf32>
    %c0_5 = arith.constant 0 : index
    %c0_6 = arith.constant 0 : index
    %9 = vector.load %arg2[%c0_5, %c0_6] : memref<1x128xf32, #tpu.memory_space<vmem>>, vector<1x128xf32>
    %10 = vector.broadcast %9 : vector<1x128xf32> to vector<64x128xf32>
    %11 = arith.addf %8, %10 : vector<64x128xf32>
    %c0_7 = arith.constant 0 : index
    %c0_8 = arith.constant 0 : index
    %12 = vector.load %arg12[%c0_7, %c0_8] : memref<64x128xf32, #tpu.memory_space<vmem>>, vector<64x128xf32>
    tpu.vector_store %arg12[%c0_7, %c0_8], %11 {strides = array<i32>} : memref<64x128xf32, #tpu.memory_space<vmem>>, vector<64x128xf32>,
    %c0_9 = arith.constant 0 : index
    %c0_10 = arith.constant 0 : index
    %13 = vector.load %arg3[%c0_9, %c0_10] : memref<64x256xf32, #tpu.memory_space<vmem>>, vector<64x256xf32>
    %c0_11 = arith.constant 0 : index
    %c0_12 = arith.constant 0 : index
    %14 = vector.load %arg4[%c0_11, %c0_12] : memref<1x128xf32, #tpu.memory_space<vmem>>, vector<1x128xf32>
    %15 = vector.shape_cast %14 : vector<1x128xf32> to vector<1x128xf32>
    %16 = vector.broadcast %15 : vector<1x128xf32> to vector<8x128xf32>
    %17 = tpu.iota {dimensions = array<i32: 1>} : vector<8x128xi32>
    %c64_i32 = arith.constant 64 : i32
    %18 = vector.broadcast %c64_i32 : i32 to vector<8x128xi32>
    %19 = arith.cmpi sge, %17, %18 : vector<8x128xi32>
    %c96_i32 = arith.constant 96 : i32
    %20 = vector.broadcast %c96_i32 : i32 to vector<8x128xi32>
    %21 = arith.cmpi slt, %17, %20 : vector<8x128xi32>
    %22 = arith.andi %19, %21 : vector<8x128xi1>
    %cst_13 = arith.constant 2.000000e+00 : f32
    %cst_14 = arith.constant 1.000000e+00 : f32
    %23 = vector.broadcast %cst_13 : f32 to vector<8x128xf32>
    %24 = vector.broadcast %cst_14 : f32 to vector<8x128xf32>
    %25 = arith.select %22, %23, %24 : vector<8x128xi1>, vector<8x128xf32>
    %cst_15 = arith.constant 1.000000e+00 : f32
    %cst_16 = arith.constant 0.000000e+00 : f32
    %26 = vector.broadcast %cst_15 : f32 to vector<8x128xf32>
    %27 = vector.broadcast %cst_16 : f32 to vector<8x128xf32>
    %28 = arith.select %22, %26, %27 : vector<8x128xi1>, vector<8x128xf32>
    %c0_17 = arith.constant 0 : index
    %c0_18 = arith.constant 0 : index
    %c0_19 = arith.constant 0 : index
    %29 = vector.load %arg7[%c0_17, %c0_18, %c0_19] : memref<2x8x32xf32, #tpu.memory_space<vmem>>, vector<1x8x32xf32>
    %30 = vector.shape_cast %29 : vector<1x8x32xf32> to vector<8x32xf32>
    %c0_20 = arith.constant 0 : index
    %c0_21 = arith.constant 0 : index
    %c0_22 = arith.constant 0 : index
    %31 = vector.load %arg8[%c0_20, %c0_21, %c0_22] : memref<2x8x32xf32, #tpu.memory_space<vmem>>, vector<1x8x32xf32>
    %32 = vector.shape_cast %31 : vector<1x8x32xf32> to vector<8x32xf32>
    %c1 = arith.constant 1 : index
    %c0_23 = arith.constant 0 : index
    %c0_24 = arith.constant 0 : index
    %33 = vector.load %arg7[%c1, %c0_23, %c0_24] : memref<2x8x32xf32, #tpu.memory_space<vmem>>, vector<1x8x32xf32>
    %34 = vector.shape_cast %33 : vector<1x8x32xf32> to vector<8x32xf32>
    %c1_25 = arith.constant 1 : index
    %c0_26 = arith.constant 0 : index
    %c0_27 = arith.constant 0 : index
    %35 = vector.load %arg8[%c1_25, %c0_26, %c0_27] : memref<2x8x32xf32, #tpu.memory_space<vmem>>, vector<1x8x32xf32>
    %36 = vector.shape_cast %35 : vector<1x8x32xf32> to vector<8x32xf32>
    %c0_28 = arith.constant 0 : index
    %c128 = arith.constant 128 : index
    %37 = vector.load %arg3[%c0_28, %c128] : memref<64x256xf32, #tpu.memory_space<vmem>>, vector<32x128xf32>
    %cst_29 = arith.constant dense<0.000000e+00> : vector<8x128xf32>
    %38 = tpu.matmul %30, %37, %cst_29 {dimension_numbers = #tpu.dot_dimension_numbers<[1], [0], [0], [1], [0, 0, 1, 1], [], []>} : vector<8x32xf32>, vector<32x128xf32>, vector<8x128xf32> -> vector<8x128xf32>
    %c0_30 = arith.constant 0 : index
    %c0_31 = arith.constant 0 : index
    %39 = vector.load %arg12[%c0_30, %c0_31] : memref<64x128xf32, #tpu.memory_space<vmem>>, vector<8x128xf32>
    %40 = arith.addf %39, %38 : vector<8x128xf32>
    %41 = arith.mulf %40, %25 : vector<8x128xf32>
    %42 = arith.negf %41 : vector<8x128xf32>
    %43 = math.exp %42 : vector<8x128xf32>
    %cst_32 = arith.constant 1.000000e+00 : f32
    %44 = vector.broadcast %cst_32 : f32 to vector<8x128xf32>
    %45 = arith.addf %44, %43 : vector<8x128xf32>
    %46 = arith.divf %44, %45 : vector<8x128xf32>
    %47 = arith.mulf %46, %25 : vector<8x128xf32>
    %48 = arith.subf %47, %28 : vector<8x128xf32>
    %49 = vector.extract_strided_slice %48 {offsets = [0, 0], sizes = [8, 32], strides = [1, 1]} : vector<8x128xf32> to vector<8x32xf32>
    %50 = vector.extract_strided_slice %48 {offsets = [0, 32], sizes = [8, 32], strides = [1, 1]} : vector<8x128xf32> to vector<8x32xf32>
    %51 = vector.extract_strided_slice %48 {offsets = [0, 64], sizes = [8, 32], strides = [1, 1]} : vector<8x128xf32> to vector<8x32xf32>
    %52 = vector.extract_strided_slice %48 {offsets = [0, 96], sizes = [8, 32], strides = [1, 1]} : vector<8x128xf32> to vector<8x32xf32>
    %53 = arith.mulf %50, %32 : vector<8x32xf32>
    %54 = arith.mulf %49, %51 : vector<8x32xf32>
    %55 = arith.addf %53, %54 : vector<8x32xf32>
    %56 = math.tanh %55 : vector<8x32xf32>
    %57 = arith.mulf %52, %56 : vector<8x32xf32>
    %58 = tpu.concatenate %57, %34 in 1 : vector<8x32xf32>, vector<8x32xf32> -> vector<8x64xf32>
    %cst_33 = arith.constant dense<0.000000e+00> : vector<8x256xf32>
    %59 = tpu.matmul %58, %13, %cst_33 {dimension_numbers = #tpu.dot_dimension_numbers<[1], [0], [0], [1], [0, 0, 1, 1], [], []>} : vector<8x64xf32>, vector<64x256xf32>, vector<8x256xf32> -> vector<8x256xf32>
    %60 = vector.extract_strided_slice %59 {offsets = [0, 0], sizes = [8, 128], strides = [1, 1]} : vector<8x256xf32> to vector<8x128xf32>
    %61 = arith.addf %60, %16 : vector<8x128xf32>
    %62 = arith.mulf %61, %25 : vector<8x128xf32>
    %63 = arith.negf %62 : vector<8x128xf32>
    %64 = math.exp %63 : vector<8x128xf32>
    %cst_34 = arith.constant 1.000000e+00 : f32
    %65 = vector.broadcast %cst_34 : f32 to vector<8x128xf32>
    %66 = arith.addf %65, %64 : vector<8x128xf32>
    %67 = arith.divf %65, %66 : vector<8x128xf32>
    %68 = arith.mulf %67, %25 : vector<8x128xf32>
    %69 = arith.subf %68, %28 : vector<8x128xf32>
    %70 = vector.extract_strided_slice %69 {offsets = [0, 0], sizes = [8, 32], strides = [1, 1]} : vector<8x128xf32> to vector<8x32xf32>
    %71 = vector.extract_strided_slice %69 {offsets = [0, 32], sizes = [8, 32], strides = [1, 1]} : vector<8x128xf32> to vector<8x32xf32>
    %72 = vector.extract_strided_slice %69 {offsets = [0, 64], sizes = [8, 32], strides = [1, 1]} : vector<8x128xf32> to vector<8x32xf32>
    %73 = vector.extract_strided_slice %69 {offsets = [0, 96], sizes = [8, 32], strides = [1, 1]} : vector<8x128xf32> to vector<8x32xf32>
    %74 = arith.mulf %71, %36 : vector<8x32xf32>
    %75 = arith.mulf %70, %72 : vector<8x32xf32>
    %76 = arith.addf %74, %75 : vector<8x32xf32>
    %77 = math.tanh %76 : vector<8x32xf32>
    %78 = arith.mulf %73, %77 : vector<8x32xf32>
    %79 = vector.extract_strided_slice %59 {offsets = [0, 128], sizes = [8, 128], strides = [1, 1]} : vector<8x256xf32> to vector<8x128xf32>
    %c0_35 = arith.constant 0 : index
    %c0_36 = arith.constant 0 : index
    %80 = vector.load %arg13[%c0_35, %c0_36] : memref<64x32xf32, #tpu.memory_space<vmem>>, vector<8x32xf32>
    tpu.vector_store %arg13[%c0_35, %c0_36], %78 {strides = array<i32>} : memref<64x32xf32, #tpu.memory_space<vmem>>, vector<8x32xf32>,
    %c8 = arith.constant 8 : index
    %c0_37 = arith.constant 0 : index
    %81 = vector.load %arg12[%c8, %c0_37] : memref<64x128xf32, #tpu.memory_space<vmem>>, vector<8x128xf32>
    %82 = arith.addf %81, %79 : vector<8x128xf32>
    %83 = arith.mulf %82, %25 : vector<8x128xf32>
    %84 = arith.negf %83 : vector<8x128xf32>
    %85 = math.exp %84 : vector<8x128xf32>
    %cst_38 = arith.constant 1.000000e+00 : f32
    %86 = vector.broadcast %cst_38 : f32 to vector<8x128xf32>
    %87 = arith.addf %86, %85 : vector<8x128xf32>
    %88 = arith.divf %86, %87 : vector<8x128xf32>
    %89 = arith.mulf %88, %25 : vector<8x128xf32>
    %90 = arith.subf %89, %28 : vector<8x128xf32>
    %91 = vector.extract_strided_slice %90 {offsets = [0, 0], sizes = [8, 32], strides = [1, 1]} : vector<8x128xf32> to vector<8x32xf32>
    %92 = vector.extract_strided_slice %90 {offsets = [0, 32], sizes = [8, 32], strides = [1, 1]} : vector<8x128xf32> to vector<8x32xf32>
    %93 = vector.extract_strided_slice %90 {offsets = [0, 64], sizes = [8, 32], strides = [1, 1]} : vector<8x128xf32> to vector<8x32xf32>
    %94 = vector.extract_strided_slice %90 {offsets = [0, 96], sizes = [8, 32], strides = [1, 1]} : vector<8x128xf32> to vector<8x32xf32>
    %95 = arith.mulf %92, %55 : vector<8x32xf32>
    %96 = arith.mulf %91, %93 : vector<8x32xf32>
    %97 = arith.addf %95, %96 : vector<8x32xf32>
    %98 = math.tanh %97 : vector<8x32xf32>
    %99 = arith.mulf %94, %98 : vector<8x32xf32>
    %100 = tpu.concatenate %99, %78 in 1 : vector<8x32xf32>, vector<8x32xf32> -> vector<8x64xf32>
    %cst_39 = arith.constant dense<0.000000e+00> : vector<8x256xf32>
    %101 = tpu.matmul %100, %13, %cst_39 {dimension_numbers = #tpu.dot_dimension_numbers<[1], [0], [0], [1], [0, 0, 1, 1], [], []>} : vector<8x64xf32>, vector<64x256xf32>, vector<8x256xf32> -> vector<8x256xf32>
    %102 = vector.extract_strided_slice %101 {offsets = [0, 0], sizes = [8, 128], strides = [1, 1]} : vector<8x256xf32> to vector<8x128xf32>
    %103 = arith.addf %102, %16 : vector<8x128xf32>
    %104 = arith.mulf %103, %25 : vector<8x128xf32>
    %105 = arith.negf %104 : vector<8x128xf32>
    %106 = math.exp %105 : vector<8x128xf32>
    %cst_40 = arith.constant 1.000000e+00 : f32
    %107 = vector.broadcast %cst_40 : f32 to vector<8x128xf32>
    %108 = arith.addf %107, %106 : vector<8x128xf32>
    %109 = arith.divf %107, %108 : vector<8x128xf32>
    %110 = arith.mulf %109, %25 : vector<8x128xf32>
    %111 = arith.subf %110, %28 : vector<8x128xf32>
    %112 = vector.extract_strided_slice %111 {offsets = [0, 0], sizes = [8, 32], strides = [1, 1]} : vector<8x128xf32> to vector<8x32xf32>
    %113 = vector.extract_strided_slice %111 {offsets = [0, 32], sizes = [8, 32], strides = [1, 1]} : vector<8x128xf32> to vector<8x32xf32>
    %114 = vector.extract_strided_slice %111 {offsets = [0, 64], sizes = [8, 32], strides = [1, 1]} : vector<8x128xf32> to vector<8x32xf32>
    %115 = vector.extract_strided_slice %111 {offsets = [0, 96], sizes = [8, 32], strides = [1, 1]} : vector<8x128xf32> to vector<8x32xf32>
    %116 = arith.mulf %113, %76 : vector<8x32xf32>
    %117 = arith.mulf %112, %114 : vector<8x32xf32>
    %118 = arith.addf %116, %117 : vector<8x32xf32>
    %119 = math.tanh %118 : vector<8x32xf32>
    %120 = arith.mulf %115, %119 : vector<8x32xf32>
    %121 = vector.extract_strided_slice %101 {offsets = [0, 128], sizes = [8, 128], strides = [1, 1]} : vector<8x256xf32> to vector<8x128xf32>
    %c8_41 = arith.constant 8 : index
    %c0_42 = arith.constant 0 : index
    %122 = vector.load %arg13[%c8_41, %c0_42] : memref<64x32xf32, #tpu.memory_space<vmem>>, vector<8x32xf32>
    tpu.vector_store %arg13[%c8_41, %c0_42], %120 {strides = array<i32>} : memref<64x32xf32, #tpu.memory_space<vmem>>, vector<8x32xf32>,
    %c16 = arith.constant 16 : index
    %c0_43 = arith.constant 0 : index
    %123 = vector.load %arg12[%c16, %c0_43] : memref<64x128xf32, #tpu.memory_space<vmem>>, vector<8x128xf32>
    %124 = arith.addf %123, %121 : vector<8x128xf32>
    %125 = arith.mulf %124, %25 : vector<8x128xf32>
    %126 = arith.negf %125 : vector<8x128xf32>
    %127 = math.exp %126 : vector<8x128xf32>
    %cst_44 = arith.constant 1.000000e+00 : f32
    %128 = vector.broadcast %cst_44 : f32 to vector<8x128xf32>
    %129 = arith.addf %128, %127 : vector<8x128xf32>
    %130 = arith.divf %128, %129 : vector<8x128xf32>
    %131 = arith.mulf %130, %25 : vector<8x128xf32>
    %132 = arith.subf %131, %28 : vector<8x128xf32>
    %133 = vector.extract_strided_slice %132 {offsets = [0, 0], sizes = [8, 32], strides = [1, 1]} : vector<8x128xf32> to vector<8x32xf32>
    %134 = vector.extract_strided_slice %132 {offsets = [0, 32], sizes = [8, 32], strides = [1, 1]} : vector<8x128xf32> to vector<8x32xf32>
    %135 = vector.extract_strided_slice %132 {offsets = [0, 64], sizes = [8, 32], strides = [1, 1]} : vector<8x128xf32> to vector<8x32xf32>
    %136 = vector.extract_strided_slice %132 {offsets = [0, 96], sizes = [8, 32], strides = [1, 1]} : vector<8x128xf32> to vector<8x32xf32>
    %137 = arith.mulf %134, %97 : vector<8x32xf32>
    %138 = arith.mulf %133, %135 : vector<8x32xf32>
    %139 = arith.addf %137, %138 : vector<8x32xf32>
    %140 = math.tanh %139 : vector<8x32xf32>
    %141 = arith.mulf %136, %140 : vector<8x32xf32>
    %142 = tpu.concatenate %141, %120 in 1 : vector<8x32xf32>, vector<8x32xf32> -> vector<8x64xf32>
    %cst_45 = arith.constant dense<0.000000e+00> : vector<8x256xf32>
    %143 = tpu.matmul %142, %13, %cst_45 {dimension_numbers = #tpu.dot_dimension_numbers<[1], [0], [0], [1], [0, 0, 1, 1], [], []>} : vector<8x64xf32>, vector<64x256xf32>, vector<8x256xf32> -> vector<8x256xf32>
    %144 = vector.extract_strided_slice %143 {offsets = [0, 0], sizes = [8, 128], strides = [1, 1]} : vector<8x256xf32> to vector<8x128xf32>
    %145 = arith.addf %144, %16 : vector<8x128xf32>
    %146 = arith.mulf %145, %25 : vector<8x128xf32>
    %147 = arith.negf %146 : vector<8x128xf32>
    %148 = math.exp %147 : vector<8x128xf32>
    %cst_46 = arith.constant 1.000000e+00 : f32
    %149 = vector.broadcast %cst_46 : f32 to vector<8x128xf32>
    %150 = arith.addf %149, %148 : vector<8x128xf32>
    %151 = arith.divf %149, %150 : vector<8x128xf32>
    %152 = arith.mulf %151, %25 : vector<8x128xf32>
    %153 = arith.subf %152, %28 : vector<8x128xf32>
    %154 = vector.extract_strided_slice %153 {offsets = [0, 0], sizes = [8, 32], strides = [1, 1]} : vector<8x128xf32> to vector<8x32xf32>
    %155 = vector.extract_strided_slice %153 {offsets = [0, 32], sizes = [8, 32], strides = [1, 1]} : vector<8x128xf32> to vector<8x32xf32>
    %156 = vector.extract_strided_slice %153 {offsets = [0, 64], sizes = [8, 32], strides = [1, 1]} : vector<8x128xf32> to vector<8x32xf32>
    %157 = vector.extract_strided_slice %153 {offsets = [0, 96], sizes = [8, 32], strides = [1, 1]} : vector<8x128xf32> to vector<8x32xf32>
    %158 = arith.mulf %155, %118 : vector<8x32xf32>
    %159 = arith.mulf %154, %156 : vector<8x32xf32>
    %160 = arith.addf %158, %159 : vector<8x32xf32>
    %161 = math.tanh %160 : vector<8x32xf32>
    %162 = arith.mulf %157, %161 : vector<8x32xf32>
    %163 = vector.extract_strided_slice %143 {offsets = [0, 128], sizes = [8, 128], strides = [1, 1]} : vector<8x256xf32> to vector<8x128xf32>
    %c16_47 = arith.constant 16 : index
    %c0_48 = arith.constant 0 : index
    %164 = vector.load %arg13[%c16_47, %c0_48] : memref<64x32xf32, #tpu.memory_space<vmem>>, vector<8x32xf32>
    tpu.vector_store %arg13[%c16_47, %c0_48], %162 {strides = array<i32>} : memref<64x32xf32, #tpu.memory_space<vmem>>, vector<8x32xf32>,
    %c24 = arith.constant 24 : index
    %c0_49 = arith.constant 0 : index
    %165 = vector.load %arg12[%c24, %c0_49] : memref<64x128xf32, #tpu.memory_space<vmem>>, vector<8x128xf32>
    %166 = arith.addf %165, %163 : vector<8x128xf32>
    %167 = arith.mulf %166, %25 : vector<8x128xf32>
    %168 = arith.negf %167 : vector<8x128xf32>
    %169 = math.exp %168 : vector<8x128xf32>
    %cst_50 = arith.constant 1.000000e+00 : f32
    %170 = vector.broadcast %cst_50 : f32 to vector<8x128xf32>
    %171 = arith.addf %170, %169 : vector<8x128xf32>
    %172 = arith.divf %170, %171 : vector<8x128xf32>
    %173 = arith.mulf %172, %25 : vector<8x128xf32>
    %174 = arith.subf %173, %28 : vector<8x128xf32>
    %175 = vector.extract_strided_slice %174 {offsets = [0, 0], sizes = [8, 32], strides = [1, 1]} : vector<8x128xf32> to vector<8x32xf32>
    %176 = vector.extract_strided_slice %174 {offsets = [0, 32], sizes = [8, 32], strides = [1, 1]} : vector<8x128xf32> to vector<8x32xf32>
    %177 = vector.extract_strided_slice %174 {offsets = [0, 64], sizes = [8, 32], strides = [1, 1]} : vector<8x128xf32> to vector<8x32xf32>
    %178 = vector.extract_strided_slice %174 {offsets = [0, 96], sizes = [8, 32], strides = [1, 1]} : vector<8x128xf32> to vector<8x32xf32>
    %179 = arith.mulf %176, %139 : vector<8x32xf32>
    %180 = arith.mulf %175, %177 : vector<8x32xf32>
    %181 = arith.addf %179, %180 : vector<8x32xf32>
    %182 = math.tanh %181 : vector<8x32xf32>
    %183 = arith.mulf %178, %182 : vector<8x32xf32>
    %184 = tpu.concatenate %183, %162 in 1 : vector<8x32xf32>, vector<8x32xf32> -> vector<8x64xf32>
    %cst_51 = arith.constant dense<0.000000e+00> : vector<8x256xf32>
    %185 = tpu.matmul %184, %13, %cst_51 {dimension_numbers = #tpu.dot_dimension_numbers<[1], [0], [0], [1], [0, 0, 1, 1], [], []>} : vector<8x64xf32>, vector<64x256xf32>, vector<8x256xf32> -> vector<8x256xf32>
    %186 = vector.extract_strided_slice %185 {offsets = [0, 0], sizes = [8, 128], strides = [1, 1]} : vector<8x256xf32> to vector<8x128xf32>
    %187 = arith.addf %186, %16 : vector<8x128xf32>
    %188 = arith.mulf %187, %25 : vector<8x128xf32>
    %189 = arith.negf %188 : vector<8x128xf32>
    %190 = math.exp %189 : vector<8x128xf32>
    %cst_52 = arith.constant 1.000000e+00 : f32
    %191 = vector.broadcast %cst_52 : f32 to vector<8x128xf32>
    %192 = arith.addf %191, %190 : vector<8x128xf32>
    %193 = arith.divf %191, %192 : vector<8x128xf32>
    %194 = arith.mulf %193, %25 : vector<8x128xf32>
    %195 = arith.subf %194, %28 : vector<8x128xf32>
    %196 = vector.extract_strided_slice %195 {offsets = [0, 0], sizes = [8, 32], strides = [1, 1]} : vector<8x128xf32> to vector<8x32xf32>
    %197 = vector.extract_strided_slice %195 {offsets = [0, 32], sizes = [8, 32], strides = [1, 1]} : vector<8x128xf32> to vector<8x32xf32>
    %198 = vector.extract_strided_slice %195 {offsets = [0, 64], sizes = [8, 32], strides = [1, 1]} : vector<8x128xf32> to vector<8x32xf32>
    %199 = vector.extract_strided_slice %195 {offsets = [0, 96], sizes = [8, 32], strides = [1, 1]} : vector<8x128xf32> to vector<8x32xf32>
    %200 = arith.mulf %197, %160 : vector<8x32xf32>
    %201 = arith.mulf %196, %198 : vector<8x32xf32>
    %202 = arith.addf %200, %201 : vector<8x32xf32>
    %203 = math.tanh %202 : vector<8x32xf32>
    %204 = arith.mulf %199, %203 : vector<8x32xf32>
    %205 = vector.extract_strided_slice %185 {offsets = [0, 128], sizes = [8, 128], strides = [1, 1]} : vector<8x256xf32> to vector<8x128xf32>
    %c24_53 = arith.constant 24 : index
    %c0_54 = arith.constant 0 : index
    %206 = vector.load %arg13[%c24_53, %c0_54] : memref<64x32xf32, #tpu.memory_space<vmem>>, vector<8x32xf32>
    tpu.vector_store %arg13[%c24_53, %c0_54], %204 {strides = array<i32>} : memref<64x32xf32, #tpu.memory_space<vmem>>, vector<8x32xf32>,
    %c32 = arith.constant 32 : index
    %c0_55 = arith.constant 0 : index
    %207 = vector.load %arg12[%c32, %c0_55] : memref<64x128xf32, #tpu.memory_space<vmem>>, vector<8x128xf32>
    %208 = arith.addf %207, %205 : vector<8x128xf32>
    %209 = arith.mulf %208, %25 : vector<8x128xf32>
    %210 = arith.negf %209 : vector<8x128xf32>
    %211 = math.exp %210 : vector<8x128xf32>
    %cst_56 = arith.constant 1.000000e+00 : f32
    %212 = vector.broadcast %cst_56 : f32 to vector<8x128xf32>
    %213 = arith.addf %212, %211 : vector<8x128xf32>
    %214 = arith.divf %212, %213 : vector<8x128xf32>
    %215 = arith.mulf %214, %25 : vector<8x128xf32>
    %216 = arith.subf %215, %28 : vector<8x128xf32>
    %217 = vector.extract_strided_slice %216 {offsets = [0, 0], sizes = [8, 32], strides = [1, 1]} : vector<8x128xf32> to vector<8x32xf32>
    %218 = vector.extract_strided_slice %216 {offsets = [0, 32], sizes = [8, 32], strides = [1, 1]} : vector<8x128xf32> to vector<8x32xf32>
    %219 = vector.extract_strided_slice %216 {offsets = [0, 64], sizes = [8, 32], strides = [1, 1]} : vector<8x128xf32> to vector<8x32xf32>
    %220 = vector.extract_strided_slice %216 {offsets = [0, 96], sizes = [8, 32], strides = [1, 1]} : vector<8x128xf32> to vector<8x32xf32>
    %221 = arith.mulf %218, %181 : vector<8x32xf32>
    %222 = arith.mulf %217, %219 : vector<8x32xf32>
    %223 = arith.addf %221, %222 : vector<8x32xf32>
    %224 = math.tanh %223 : vector<8x32xf32>
    %225 = arith.mulf %220, %224 : vector<8x32xf32>
    %226 = tpu.concatenate %225, %204 in 1 : vector<8x32xf32>, vector<8x32xf32> -> vector<8x64xf32>
    %cst_57 = arith.constant dense<0.000000e+00> : vector<8x256xf32>
    %227 = tpu.matmul %226, %13, %cst_57 {dimension_numbers = #tpu.dot_dimension_numbers<[1], [0], [0], [1], [0, 0, 1, 1], [], []>} : vector<8x64xf32>, vector<64x256xf32>, vector<8x256xf32> -> vector<8x256xf32>
    %228 = vector.extract_strided_slice %227 {offsets = [0, 0], sizes = [8, 128], strides = [1, 1]} : vector<8x256xf32> to vector<8x128xf32>
    %229 = arith.addf %228, %16 : vector<8x128xf32>
    %230 = arith.mulf %229, %25 : vector<8x128xf32>
    %231 = arith.negf %230 : vector<8x128xf32>
    %232 = math.exp %231 : vector<8x128xf32>
    %cst_58 = arith.constant 1.000000e+00 : f32
    %233 = vector.broadcast %cst_58 : f32 to vector<8x128xf32>
    %234 = arith.addf %233, %232 : vector<8x128xf32>
    %235 = arith.divf %233, %234 : vector<8x128xf32>
    %236 = arith.mulf %235, %25 : vector<8x128xf32>
    %237 = arith.subf %236, %28 : vector<8x128xf32>
    %238 = vector.extract_strided_slice %237 {offsets = [0, 0], sizes = [8, 32], strides = [1, 1]} : vector<8x128xf32> to vector<8x32xf32>
    %239 = vector.extract_strided_slice %237 {offsets = [0, 32], sizes = [8, 32], strides = [1, 1]} : vector<8x128xf32> to vector<8x32xf32>
    %240 = vector.extract_strided_slice %237 {offsets = [0, 64], sizes = [8, 32], strides = [1, 1]} : vector<8x128xf32> to vector<8x32xf32>
    %241 = vector.extract_strided_slice %237 {offsets = [0, 96], sizes = [8, 32], strides = [1, 1]} : vector<8x128xf32> to vector<8x32xf32>
    %242 = arith.mulf %239, %202 : vector<8x32xf32>
    %243 = arith.mulf %238, %240 : vector<8x32xf32>
    %244 = arith.addf %242, %243 : vector<8x32xf32>
    %245 = math.tanh %244 : vector<8x32xf32>
    %246 = arith.mulf %241, %245 : vector<8x32xf32>
    %247 = vector.extract_strided_slice %227 {offsets = [0, 128], sizes = [8, 128], strides = [1, 1]} : vector<8x256xf32> to vector<8x128xf32>
    %c32_59 = arith.constant 32 : index
    %c0_60 = arith.constant 0 : index
    %248 = vector.load %arg13[%c32_59, %c0_60] : memref<64x32xf32, #tpu.memory_space<vmem>>, vector<8x32xf32>
    tpu.vector_store %arg13[%c32_59, %c0_60], %246 {strides = array<i32>} : memref<64x32xf32, #tpu.memory_space<vmem>>, vector<8x32xf32>,
    %c40 = arith.constant 40 : index
    %c0_61 = arith.constant 0 : index
    %249 = vector.load %arg12[%c40, %c0_61] : memref<64x128xf32, #tpu.memory_space<vmem>>, vector<8x128xf32>
    %250 = arith.addf %249, %247 : vector<8x128xf32>
    %251 = arith.mulf %250, %25 : vector<8x128xf32>
    %252 = arith.negf %251 : vector<8x128xf32>
    %253 = math.exp %252 : vector<8x128xf32>
    %cst_62 = arith.constant 1.000000e+00 : f32
    %254 = vector.broadcast %cst_62 : f32 to vector<8x128xf32>
    %255 = arith.addf %254, %253 : vector<8x128xf32>
    %256 = arith.divf %254, %255 : vector<8x128xf32>
    %257 = arith.mulf %256, %25 : vector<8x128xf32>
    %258 = arith.subf %257, %28 : vector<8x128xf32>
    %259 = vector.extract_strided_slice %258 {offsets = [0, 0], sizes = [8, 32], strides = [1, 1]} : vector<8x128xf32> to vector<8x32xf32>
    %260 = vector.extract_strided_slice %258 {offsets = [0, 32], sizes = [8, 32], strides = [1, 1]} : vector<8x128xf32> to vector<8x32xf32>
    %261 = vector.extract_strided_slice %258 {offsets = [0, 64], sizes = [8, 32], strides = [1, 1]} : vector<8x128xf32> to vector<8x32xf32>
    %262 = vector.extract_strided_slice %258 {offsets = [0, 96], sizes = [8, 32], strides = [1, 1]} : vector<8x128xf32> to vector<8x32xf32>
    %263 = arith.mulf %260, %223 : vector<8x32xf32>
    %264 = arith.mulf %259, %261 : vector<8x32xf32>
    %265 = arith.addf %263, %264 : vector<8x32xf32>
    %266 = math.tanh %265 : vector<8x32xf32>
    %267 = arith.mulf %262, %266 : vector<8x32xf32>
    %268 = tpu.concatenate %267, %246 in 1 : vector<8x32xf32>, vector<8x32xf32> -> vector<8x64xf32>
    %cst_63 = arith.constant dense<0.000000e+00> : vector<8x256xf32>
    %269 = tpu.matmul %268, %13, %cst_63 {dimension_numbers = #tpu.dot_dimension_numbers<[1], [0], [0], [1], [0, 0, 1, 1], [], []>} : vector<8x64xf32>, vector<64x256xf32>, vector<8x256xf32> -> vector<8x256xf32>
    %270 = vector.extract_strided_slice %269 {offsets = [0, 0], sizes = [8, 128], strides = [1, 1]} : vector<8x256xf32> to vector<8x128xf32>
    %271 = arith.addf %270, %16 : vector<8x128xf32>
    %272 = arith.mulf %271, %25 : vector<8x128xf32>
    %273 = arith.negf %272 : vector<8x128xf32>
    %274 = math.exp %273 : vector<8x128xf32>
    %cst_64 = arith.constant 1.000000e+00 : f32
    %275 = vector.broadcast %cst_64 : f32 to vector<8x128xf32>
    %276 = arith.addf %275, %274 : vector<8x128xf32>
    %277 = arith.divf %275, %276 : vector<8x128xf32>
    %278 = arith.mulf %277, %25 : vector<8x128xf32>
    %279 = arith.subf %278, %28 : vector<8x128xf32>
    %280 = vector.extract_strided_slice %279 {offsets = [0, 0], sizes = [8, 32], strides = [1, 1]} : vector<8x128xf32> to vector<8x32xf32>
    %281 = vector.extract_strided_slice %279 {offsets = [0, 32], sizes = [8, 32], strides = [1, 1]} : vector<8x128xf32> to vector<8x32xf32>
    %282 = vector.extract_strided_slice %279 {offsets = [0, 64], sizes = [8, 32], strides = [1, 1]} : vector<8x128xf32> to vector<8x32xf32>
    %283 = vector.extract_strided_slice %279 {offsets = [0, 96], sizes = [8, 32], strides = [1, 1]} : vector<8x128xf32> to vector<8x32xf32>
    %284 = arith.mulf %281, %244 : vector<8x32xf32>
    %285 = arith.mulf %280, %282 : vector<8x32xf32>
    %286 = arith.addf %284, %285 : vector<8x32xf32>
    %287 = math.tanh %286 : vector<8x32xf32>
    %288 = arith.mulf %283, %287 : vector<8x32xf32>
    %289 = vector.extract_strided_slice %269 {offsets = [0, 128], sizes = [8, 128], strides = [1, 1]} : vector<8x256xf32> to vector<8x128xf32>
    %c40_65 = arith.constant 40 : index
    %c0_66 = arith.constant 0 : index
    %290 = vector.load %arg13[%c40_65, %c0_66] : memref<64x32xf32, #tpu.memory_space<vmem>>, vector<8x32xf32>
    tpu.vector_store %arg13[%c40_65, %c0_66], %288 {strides = array<i32>} : memref<64x32xf32, #tpu.memory_space<vmem>>, vector<8x32xf32>,
    %c48 = arith.constant 48 : index
    %c0_67 = arith.constant 0 : index
    %291 = vector.load %arg12[%c48, %c0_67] : memref<64x128xf32, #tpu.memory_space<vmem>>, vector<8x128xf32>
    %292 = arith.addf %291, %289 : vector<8x128xf32>
    %293 = arith.mulf %292, %25 : vector<8x128xf32>
    %294 = arith.negf %293 : vector<8x128xf32>
    %295 = math.exp %294 : vector<8x128xf32>
    %cst_68 = arith.constant 1.000000e+00 : f32
    %296 = vector.broadcast %cst_68 : f32 to vector<8x128xf32>
    %297 = arith.addf %296, %295 : vector<8x128xf32>
    %298 = arith.divf %296, %297 : vector<8x128xf32>
    %299 = arith.mulf %298, %25 : vector<8x128xf32>
    %300 = arith.subf %299, %28 : vector<8x128xf32>
    %301 = vector.extract_strided_slice %300 {offsets = [0, 0], sizes = [8, 32], strides = [1, 1]} : vector<8x128xf32> to vector<8x32xf32>
    %302 = vector.extract_strided_slice %300 {offsets = [0, 32], sizes = [8, 32], strides = [1, 1]} : vector<8x128xf32> to vector<8x32xf32>
    %303 = vector.extract_strided_slice %300 {offsets = [0, 64], sizes = [8, 32], strides = [1, 1]} : vector<8x128xf32> to vector<8x32xf32>
    %304 = vector.extract_strided_slice %300 {offsets = [0, 96], sizes = [8, 32], strides = [1, 1]} : vector<8x128xf32> to vector<8x32xf32>
    %305 = arith.mulf %302, %265 : vector<8x32xf32>
    %306 = arith.mulf %301, %303 : vector<8x32xf32>
    %307 = arith.addf %305, %306 : vector<8x32xf32>
    %308 = math.tanh %307 : vector<8x32xf32>
    %309 = arith.mulf %304, %308 : vector<8x32xf32>
    %310 = tpu.concatenate %309, %288 in 1 : vector<8x32xf32>, vector<8x32xf32> -> vector<8x64xf32>
    %cst_69 = arith.constant dense<0.000000e+00> : vector<8x256xf32>
    %311 = tpu.matmul %310, %13, %cst_69 {dimension_numbers = #tpu.dot_dimension_numbers<[1], [0], [0], [1], [0, 0, 1, 1], [], []>} : vector<8x64xf32>, vector<64x256xf32>, vector<8x256xf32> -> vector<8x256xf32>
    %312 = vector.extract_strided_slice %311 {offsets = [0, 0], sizes = [8, 128], strides = [1, 1]} : vector<8x256xf32> to vector<8x128xf32>
    %313 = arith.addf %312, %16 : vector<8x128xf32>
    %314 = arith.mulf %313, %25 : vector<8x128xf32>
    %315 = arith.negf %314 : vector<8x128xf32>
    %316 = math.exp %315 : vector<8x128xf32>
    %cst_70 = arith.constant 1.000000e+00 : f32
    %317 = vector.broadcast %cst_70 : f32 to vector<8x128xf32>
    %318 = arith.addf %317, %316 : vector<8x128xf32>
    %319 = arith.divf %317, %318 : vector<8x128xf32>
    %320 = arith.mulf %319, %25 : vector<8x128xf32>
    %321 = arith.subf %320, %28 : vector<8x128xf32>
    %322 = vector.extract_strided_slice %321 {offsets = [0, 0], sizes = [8, 32], strides = [1, 1]} : vector<8x128xf32> to vector<8x32xf32>
    %323 = vector.extract_strided_slice %321 {offsets = [0, 32], sizes = [8, 32], strides = [1, 1]} : vector<8x128xf32> to vector<8x32xf32>
    %324 = vector.extract_strided_slice %321 {offsets = [0, 64], sizes = [8, 32], strides = [1, 1]} : vector<8x128xf32> to vector<8x32xf32>
    %325 = vector.extract_strided_slice %321 {offsets = [0, 96], sizes = [8, 32], strides = [1, 1]} : vector<8x128xf32> to vector<8x32xf32>
    %326 = arith.mulf %323, %286 : vector<8x32xf32>
    %327 = arith.mulf %322, %324 : vector<8x32xf32>
    %328 = arith.addf %326, %327 : vector<8x32xf32>
    %329 = math.tanh %328 : vector<8x32xf32>
    %330 = arith.mulf %325, %329 : vector<8x32xf32>
    %331 = vector.extract_strided_slice %311 {offsets = [0, 128], sizes = [8, 128], strides = [1, 1]} : vector<8x256xf32> to vector<8x128xf32>
    %c48_71 = arith.constant 48 : index
    %c0_72 = arith.constant 0 : index
    %332 = vector.load %arg13[%c48_71, %c0_72] : memref<64x32xf32, #tpu.memory_space<vmem>>, vector<8x32xf32>
    tpu.vector_store %arg13[%c48_71, %c0_72], %330 {strides = array<i32>} : memref<64x32xf32, #tpu.memory_space<vmem>>, vector<8x32xf32>,
    %c56 = arith.constant 56 : index
    %c0_73 = arith.constant 0 : index
    %333 = vector.load %arg12[%c56, %c0_73] : memref<64x128xf32, #tpu.memory_space<vmem>>, vector<8x128xf32>
    %334 = arith.addf %333, %331 : vector<8x128xf32>
    %335 = arith.mulf %334, %25 : vector<8x128xf32>
    %336 = arith.negf %335 : vector<8x128xf32>
    %337 = math.exp %336 : vector<8x128xf32>
    %cst_74 = arith.constant 1.000000e+00 : f32
    %338 = vector.broadcast %cst_74 : f32 to vector<8x128xf32>
    %339 = arith.addf %338, %337 : vector<8x128xf32>
    %340 = arith.divf %338, %339 : vector<8x128xf32>
    %341 = arith.mulf %340, %25 : vector<8x128xf32>
    %342 = arith.subf %341, %28 : vector<8x128xf32>
    %343 = vector.extract_strided_slice %342 {offsets = [0, 0], sizes = [8, 32], strides = [1, 1]} : vector<8x128xf32> to vector<8x32xf32>
    %344 = vector.extract_strided_slice %342 {offsets = [0, 32], sizes = [8, 32], strides = [1, 1]} : vector<8x128xf32> to vector<8x32xf32>
    %345 = vector.extract_strided_slice %342 {offsets = [0, 64], sizes = [8, 32], strides = [1, 1]} : vector<8x128xf32> to vector<8x32xf32>
    %346 = vector.extract_strided_slice %342 {offsets = [0, 96], sizes = [8, 32], strides = [1, 1]} : vector<8x128xf32> to vector<8x32xf32>
    %347 = arith.mulf %344, %307 : vector<8x32xf32>
    %348 = arith.mulf %343, %345 : vector<8x32xf32>
    %349 = arith.addf %347, %348 : vector<8x32xf32>
    %350 = math.tanh %349 : vector<8x32xf32>
    %351 = arith.mulf %346, %350 : vector<8x32xf32>
    %352 = tpu.concatenate %351, %330 in 1 : vector<8x32xf32>, vector<8x32xf32> -> vector<8x64xf32>
    %cst_75 = arith.constant dense<0.000000e+00> : vector<8x256xf32>
    %353 = tpu.matmul %352, %13, %cst_75 {dimension_numbers = #tpu.dot_dimension_numbers<[1], [0], [0], [1], [0, 0, 1, 1], [], []>} : vector<8x64xf32>, vector<64x256xf32>, vector<8x256xf32> -> vector<8x256xf32>
    %354 = vector.extract_strided_slice %353 {offsets = [0, 0], sizes = [8, 128], strides = [1, 1]} : vector<8x256xf32> to vector<8x128xf32>
    %355 = arith.addf %354, %16 : vector<8x128xf32>
    %356 = arith.mulf %355, %25 : vector<8x128xf32>
    %357 = arith.negf %356 : vector<8x128xf32>
    %358 = math.exp %357 : vector<8x128xf32>
    %cst_76 = arith.constant 1.000000e+00 : f32
    %359 = vector.broadcast %cst_76 : f32 to vector<8x128xf32>
    %360 = arith.addf %359, %358 : vector<8x128xf32>
    %361 = arith.divf %359, %360 : vector<8x128xf32>
    %362 = arith.mulf %361, %25 : vector<8x128xf32>
    %363 = arith.subf %362, %28 : vector<8x128xf32>
    %364 = vector.extract_strided_slice %363 {offsets = [0, 0], sizes = [8, 32], strides = [1, 1]} : vector<8x128xf32> to vector<8x32xf32>
    %365 = vector.extract_strided_slice %363 {offsets = [0, 32], sizes = [8, 32], strides = [1, 1]} : vector<8x128xf32> to vector<8x32xf32>
    %366 = vector.extract_strided_slice %363 {offsets = [0, 64], sizes = [8, 32], strides = [1, 1]} : vector<8x128xf32> to vector<8x32xf32>
    %367 = vector.extract_strided_slice %363 {offsets = [0, 96], sizes = [8, 32], strides = [1, 1]} : vector<8x128xf32> to vector<8x32xf32>
    %368 = arith.mulf %365, %328 : vector<8x32xf32>
    %369 = arith.mulf %364, %366 : vector<8x32xf32>
    %370 = arith.addf %368, %369 : vector<8x32xf32>
    %371 = math.tanh %370 : vector<8x32xf32>
    %372 = arith.mulf %367, %371 : vector<8x32xf32>
    %c56_77 = arith.constant 56 : index
    %c0_78 = arith.constant 0 : index
    %373 = vector.load %arg13[%c56_77, %c0_78] : memref<64x32xf32, #tpu.memory_space<vmem>>, vector<8x32xf32>
    tpu.vector_store %arg13[%c56_77, %c0_78], %372 {strides = array<i32>} : memref<64x32xf32, #tpu.memory_space<vmem>>, vector<8x32xf32>,
    %c0_79 = arith.constant 0 : index
    %c0_80 = arith.constant 0 : index
    %c0_81 = arith.constant 0 : index
    %374 = vector.load %arg10[%c0_79, %c0_80, %c0_81] : memref<2x8x32xf32, #tpu.memory_space<vmem>>, vector<1x8x32xf32>
    %375 = vector.shape_cast %374 : vector<1x8x32xf32> to vector<8x32xf32>
    %376 = vector.shape_cast %351 : vector<8x32xf32> to vector<1x8x32xf32>
    tpu.vector_store %arg10[%c0_79, %c0_80, %c0_81], %376 {strides = array<i32>} : memref<2x8x32xf32, #tpu.memory_space<vmem>>, vector<1x8x32xf32>,
    %c1_82 = arith.constant 1 : index
    %c0_83 = arith.constant 0 : index
    %c0_84 = arith.constant 0 : index
    %377 = vector.load %arg10[%c1_82, %c0_83, %c0_84] : memref<2x8x32xf32, #tpu.memory_space<vmem>>, vector<1x8x32xf32>
    %378 = vector.shape_cast %377 : vector<1x8x32xf32> to vector<8x32xf32>
    %379 = vector.shape_cast %372 : vector<8x32xf32> to vector<1x8x32xf32>
    tpu.vector_store %arg10[%c1_82, %c0_83, %c0_84], %379 {strides = array<i32>} : memref<2x8x32xf32, #tpu.memory_space<vmem>>, vector<1x8x32xf32>,
    %c0_85 = arith.constant 0 : index
    %c0_86 = arith.constant 0 : index
    %c0_87 = arith.constant 0 : index
    %380 = vector.load %arg11[%c0_85, %c0_86, %c0_87] : memref<2x8x32xf32, #tpu.memory_space<vmem>>, vector<1x8x32xf32>
    %381 = vector.shape_cast %380 : vector<1x8x32xf32> to vector<8x32xf32>
    %382 = vector.shape_cast %349 : vector<8x32xf32> to vector<1x8x32xf32>
    tpu.vector_store %arg11[%c0_85, %c0_86, %c0_87], %382 {strides = array<i32>} : memref<2x8x32xf32, #tpu.memory_space<vmem>>, vector<1x8x32xf32>,
    %c1_88 = arith.constant 1 : index
    %c0_89 = arith.constant 0 : index
    %c0_90 = arith.constant 0 : index
    %383 = vector.load %arg11[%c1_88, %c0_89, %c0_90] : memref<2x8x32xf32, #tpu.memory_space<vmem>>, vector<1x8x32xf32>
    %384 = vector.shape_cast %383 : vector<1x8x32xf32> to vector<8x32xf32>
    %385 = vector.shape_cast %370 : vector<8x32xf32> to vector<1x8x32xf32>
    tpu.vector_store %arg11[%c1_88, %c0_89, %c0_90], %385 {strides = array<i32>} : memref<2x8x32xf32, #tpu.memory_space<vmem>>, vector<1x8x32xf32>,
    %c0_91 = arith.constant 0 : index
    %c0_92 = arith.constant 0 : index
    %386 = vector.load %arg13[%c0_91, %c0_92] : memref<64x32xf32, #tpu.memory_space<vmem>>, vector<64x32xf32>
    %c0_93 = arith.constant 0 : index
    %c0_94 = arith.constant 0 : index
    %387 = vector.load %arg5[%c0_93, %c0_94] : memref<32x128xf32, #tpu.memory_space<vmem>>, vector<32x128xf32>
    %cst_95 = arith.constant dense<0.000000e+00> : vector<64x128xf32>
    %388 = tpu.matmul %386, %387, %cst_95 {dimension_numbers = #tpu.dot_dimension_numbers<[1], [0], [0], [1], [0, 0, 1, 1], [], []>} : vector<64x32xf32>, vector<32x128xf32>, vector<64x128xf32> -> vector<64x128xf32>
    %c0_96 = arith.constant 0 : index
    %c0_97 = arith.constant 0 : index
    %389 = vector.load %arg6[%c0_96, %c0_97] : memref<1x128xf32, #tpu.memory_space<vmem>>, vector<1x128xf32>
    %390 = vector.broadcast %389 : vector<1x128xf32> to vector<64x128xf32>
    %391 = arith.addf %388, %390 : vector<64x128xf32>
    %cst_98 = arith.constant dense<0xFF800000> : vector<64xf32>
    %392 = vector.multi_reduction <maximumf>, %391, %cst_98 [1] : vector<64x128xf32> to vector<64xf32>
    %393 = vector.shape_cast %392 : vector<64xf32> to vector<64x1xf32>
    %394 = vector.broadcast %393 : vector<64x1xf32> to vector<64x128xf32>
    %395 = arith.subf %391, %394 : vector<64x128xf32>
    %396 = math.exp %395 : vector<64x128xf32>
    %cst_99 = arith.constant dense<0.000000e+00> : vector<64xf32>
    %397 = vector.multi_reduction <add>, %396, %cst_99 [1] : vector<64x128xf32> to vector<64xf32>
    %398 = vector.shape_cast %397 : vector<64xf32> to vector<64x1xf32>
    %399 = math.log %398 : vector<64x1xf32>
    %400 = vector.broadcast %399 : vector<64x1xf32> to vector<64x128xf32>
    %401 = arith.subf %395, %400 : vector<64x128xf32>
    %c0_100 = arith.constant 0 : index
    %c0_101 = arith.constant 0 : index
    %402 = vector.load %arg9[%c0_100, %c0_101] : memref<64x128xf32, #tpu.memory_space<vmem>>, vector<64x128xf32>
    tpu.vector_store %arg9[%c0_100, %c0_101], %401 {strides = array<i32>} : memref<64x128xf32, #tpu.memory_space<vmem>>, vector<64x128xf32>,
    return
  }
}

</mosaic_0001>

<llo_original>
// kernel: rnn_model_forward.1
$region0: #{rnn_model_forward.1}
  #allocation0 [shape = 'u32[]', space=smem, size = 0x4, offset = 0x4, fixed_abs, tag = 'smem constant byte address 0x4 - core index']
  #allocation1 [shape = 'u32[72,128]{1,0:T(1,128)}', space=vmem, size = 0x9000, scoped, tag = 'internal scratch']
  #allocation2 [shape = 'f32[64,128]{1,0:T(8,128)}', space=vmem, size = 0x8000, scoped, tag = 'scratch operand']
  #allocation3 [shape = 'f32[64,32]{1,0:T(8,128)}', space=vmem, size = 0x8000, scoped, tag = 'scratch operand']
  %s0 = inlined_call_operand.vmem [shape: s32[64,1], index: 0, kind: input, shape index: {}]
  %s1 = inlined_call_operand.vmem [shape: f32[64,128], index: 1, kind: input, shape index: {}]
  %s2 = inlined_call_operand.vmem [shape: f32[1,128], index: 2, kind: input, shape index: {}]
  %s3 = inlined_call_operand.hbm [shape: f32[64,256], index: 3, kind: input, shape index: {}]
  %s4 = inlined_call_operand.vmem [shape: f32[1,128], index: 4, kind: input, shape index: {}]
  %s5 = inlined_call_operand.hbm [shape: f32[32,128], index: 5, kind: input, shape index: {}]
  %s6 = inlined_call_operand.vmem [shape: f32[1,128], index: 6, kind: input, shape index: {}]
  %s7 = inlined_call_operand.hbm [shape: f32[2,8,32], index: 7, kind: input, shape index: {}]
  %s8 = inlined_call_operand.hbm [shape: f32[2,8,32], index: 8, kind: input, shape index: {}]
  %s9 = inlined_call_operand.hbm [shape: f32[64,128], index: 9, kind: output, shape index: {0}]
  %s10 = inlined_call_operand.hbm [shape: f32[2,8,32], index: 10, kind: output, shape index: {1}]
  %s11 = inlined_call_operand.hbm [shape: f32[2,8,32], index: 11, kind: output, shape index: {2}]
  %12 = xla_tuple %s9, %s10, %s11
  %s13 = sld [smem:[#allocation0]]
  $region78: #{rnn_model_forward.1} parent=0
    _
  %s15 = ssub.s32 1, %s13
  %s16 = scalar_select 0, %s15, %s13
  $region1: #{rnn_model_forward.1} parent=0
    #allocation4 [shape = 'u8[65536]{0}', space=vmem, size = 0x10000, scoped, tag = 'input window, operand 3, single buffered']
    #allocation5 [shape = 's32[1]{0}', space=sflag, size = 0x4, scoped, tag = 'scoped memory for rnn_model_forward.1']
    #allocation6 [shape = 's32[1]{0}', space=sflag, size = 0x4, scoped, tag = 'scoped memory for rnn_model_forward.1']
    #allocation7 [shape = 'u8[16384]{0}', space=vmem, size = 0x4000, scoped, tag = 'input window, operand 5, single buffered']
    #allocation8 [shape = 's32[1]{0}', space=sflag, size = 0x4, scoped, tag = 'scoped memory for rnn_model_forward.1']
    #allocation9 [shape = 'u8[8192]{0}', space=vmem, size = 0x2000, scoped, tag = 'input window, operand 7, single buffered']
    #allocation10 [shape = 'u8[8192]{0}', space=vmem, size = 0x2000, scoped, tag = 'input window, operand 8, single buffered']
    #allocation11 [shape = 's32[1]{0}', space=sflag, size = 0x4, scoped, tag = 'scoped memory for rnn_model_forward.1']
    #allocation12 [shape = 'u8[32768]{0}', space=vmem, size = 0x8000, scoped, tag = 'output window, operand 0, single buffered']
    #allocation13 [shape = 'u8[8192]{0}', space=vmem, size = 0x2000, scoped, tag = 'output window, operand 1, single buffered']
    #allocation14 [shape = 's32[1]{0}', space=sflag, size = 0x4, scoped, tag = 'scoped memory for rnn_model_forward.1']
    #allocation15 [shape = 'u8[8192]{0}', space=vmem, size = 0x2000, scoped, tag = 'output window, operand 2, single buffered']
    %17 = vsyncpa [#allocation5], 0
    %18 = vsyncpa [#allocation8], 0
    %19 = vsyncpa [#allocation11], 0
    %20 = vsyncpa [#allocation6], 0
    %21 = vsyncpa [#allocation14], 0
    // Predicated region
    $region2: #{rnn_model_forward.1} parent=1 // pred_check
      _
    $region3: #{rnn_model_forward.1} parent=1 // pred_check_branch
      %23 = sbr.rel (0) target = $region5
    $region4: #{rnn_model_forward.1} parent=1 // pred_region
      _
    $region5: #{rnn_model_forward.1} parent=1 // pred_fallthru
      _
    // Predicated region
    $region6: #{rnn_model_forward.1} parent=1 // pred_check
      _
    $region7: #{rnn_model_forward.1} parent=1 // pred_check_branch
      %25 = sbr.rel (0) target = $region9
    $region8: #{rnn_model_forward.1} parent=1 // pred_region
      _
    $region9: #{rnn_model_forward.1} parent=1 // pred_fallthru
      _
    // Predicated region
    $region10: #{rnn_model_forward.1} parent=1 // pred_check
      _
    $region11: #{rnn_model_forward.1} parent=1 // pred_check_branch
      %27 = sbr.rel (0) target = $region13
    $region12: #{rnn_model_forward.1} parent=1 // pred_region
      _
    $region13: #{rnn_model_forward.1} parent=1 // pred_fallthru
      _
    // Predicated region
    $region14: #{rnn_model_forward.1} parent=1 // pred_check
      _
    $region15: #{rnn_model_forward.1} parent=1 // pred_check_branch
      %29 = sbr.rel (0) target = $region17
    $region16: #{rnn_model_forward.1} parent=1 // pred_region
      %31 = vsyncadd [#allocation5], 0
      %s32 = sshll.u32 %s3, 4
      %s33 = int_to_ptr.hbm [resolvable:$true] %s32
      %s34 = sshll.u32 [#allocation4], 4
      %s35 = int_to_ptr.vmem [resolvable:$true] %s34
      %40 = dma.hbm_to_vmem [thread:$0]  %s33, 2048, %s35, [#allocation5], 256, 256, 16
    $region17: #{rnn_model_forward.1} parent=1 // pred_fallthru
      _
    // Predicated region
    $region18: #{rnn_model_forward.1} parent=1 // pred_check
      _
    $region19: #{rnn_model_forward.1} parent=1 // pred_check_branch
      %42 = sbr.rel (0) target = $region21
    $region20: #{rnn_model_forward.1} parent=1 // pred_region
      _
    $region21: #{rnn_model_forward.1} parent=1 // pred_fallthru
      _
    // Predicated region
    $region22: #{rnn_model_forward.1} parent=1 // pred_check
      _
    $region23: #{rnn_model_forward.1} parent=1 // pred_check_branch
      %44 = sbr.rel (0) target = $region25
    $region24: #{rnn_model_forward.1} parent=1 // pred_region
      %46 = vsyncadd [#allocation8], 0
      %s47 = sshll.u32 %s5, 4
      %s48 = int_to_ptr.hbm [resolvable:$true] %s47
      %s49 = sshll.u32 [#allocation7], 4
      %s50 = int_to_ptr.vmem [resolvable:$true] %s49
      %55 = dma.hbm_to_vmem [thread:$0]  %s48, 512, %s50, [#allocation8], 128, 128, 8
    $region25: #{rnn_model_forward.1} parent=1 // pred_fallthru
      _
    // Predicated region
    $region26: #{rnn_model_forward.1} parent=1 // pred_check
      _
    $region27: #{rnn_model_forward.1} parent=1 // pred_check_branch
      %57 = sbr.rel (0) target = $region29
    $region28: #{rnn_model_forward.1} parent=1 // pred_region
      _
    $region29: #{rnn_model_forward.1} parent=1 // pred_fallthru
      _
    // Predicated region
    $region30: #{rnn_model_forward.1} parent=1 // pred_check
      _
    $region31: #{rnn_model_forward.1} parent=1 // pred_check_branch
      %59 = sbr.rel (0) target = $region33
    $region32: #{rnn_model_forward.1} parent=1 // pred_region
      %61 = vsyncadd [#allocation8], 0
      %s62 = sshll.u32 %s7, 4
      %s63 = int_to_ptr.hbm [resolvable:$true] %s62
      %s64 = sshll.u32 [#allocation9], 4
      %s65 = int_to_ptr.vmem [resolvable:$true] %s64
      %70 = dma.hbm_to_vmem [thread:$0]  %s63, 256, %s65, [#allocation8], 128, 128, 8
    $region33: #{rnn_model_forward.1} parent=1 // pred_fallthru
      _
    // Predicated region
    $region34: #{rnn_model_forward.1} parent=1 // pred_check
      _
    $region35: #{rnn_model_forward.1} parent=1 // pred_check_branch
      %72 = sbr.rel (0) target = $region37
    $region36: #{rnn_model_forward.1} parent=1 // pred_region
      %74 = vsyncadd [#allocation11], 0
      %s75 = sshll.u32 %s8, 4
      %s76 = int_to_ptr.hbm [resolvable:$true] %s75
      %s77 = sshll.u32 [#allocation10], 4
      %s78 = int_to_ptr.vmem [resolvable:$true] %s77
      %83 = dma.hbm_to_vmem [thread:$0]  %s76, 256, %s78, [#allocation11], 128, 128, 8
    $region37: #{rnn_model_forward.1} parent=1 // pred_fallthru
      _
    // Predicated region
    $region38: #{rnn_model_forward.1} parent=1 // pred_check
      _
    $region39: #{rnn_model_forward.1} parent=1 // pred_check_branch
      %85 = sbr.rel (0) target = $region41
    $region40: #{rnn_model_forward.1} parent=1 // pred_region
      %87 = dma.done [#allocation5], 2048
    $region41: #{rnn_model_forward.1} parent=1 // pred_fallthru
      _
    // Predicated region
    $region42: #{rnn_model_forward.1} parent=1 // pred_check
      _
    $region43: #{rnn_model_forward.1} parent=1 // pred_check_branch
      %89 = sbr.rel (0) target = $region45
    $region44: #{rnn_model_forward.1} parent=1 // pred_region
      %91 = dma.done [#allocation8], 512
    $region45: #{rnn_model_forward.1} parent=1 // pred_fallthru
      _
    // Predicated region
    $region46: #{rnn_model_forward.1} parent=1 // pred_check
      _
    $region47: #{rnn_model_forward.1} parent=1 // pred_check_branch
      %93 = sbr.rel (0) target = $region49
    $region48: #{rnn_model_forward.1} parent=1 // pred_region
      %95 = dma.done [#allocation8], 256
    $region49: #{rnn_model_forward.1} parent=1 // pred_fallthru
      _
    // Predicated region
    $region50: #{rnn_model_forward.1} parent=1 // pred_check
      _
    $region51: #{rnn_model_forward.1} parent=1 // pred_check_branch
      %97 = sbr.rel (0) target = $region53
    $region52: #{rnn_model_forward.1} parent=1 // pred_region
      %99 = dma.done [#allocation11], 256
    $region53: #{rnn_model_forward.1} parent=1 // pred_fallthru
      _
    %v100 = vld [vmem:[%s0] sm:$0xff]
    %v101 = vld [vmem:[%s0 + $0x8] sm:$0xff]
    %v102 = vld [vmem:[%s0 + $0x10] sm:$0xff]
    %v103 = vld [vmem:[%s0 + $0x18] sm:$0xff]
    %v104 = vld [vmem:[%s0 + $0x20] sm:$0xff]
    %v105 = vld [vmem:[%s0 + $0x28] sm:$0xff]
    %v106 = vld [vmem:[%s0 + $0x30] sm:$0xff]
    %v107 = vld [vmem:[%s0 + $0x38] sm:$0xff]
    %v108 = vlaneseq
    %v109 = vand.u32 %v108, 127
    %110 = vset.pattern.permute.xlu0 0
    %111 = vperm.xlu0 %110, %v100
    %v112 = vpop.permute.xlu0 %111
    %113 = vset.pattern.permute.xlu0 0
    %114 = vperm.xlu0 %113, %v101
    %v115 = vpop.permute.xlu0 %114
    %116 = vset.pattern.permute.xlu0 0
    %117 = vperm.xlu0 %116, %v102
    %v118 = vpop.permute.xlu0 %117
    %119 = vset.pattern.permute.xlu0 0
    %120 = vperm.xlu0 %119, %v103
    %v121 = vpop.permute.xlu0 %120
    %122 = vset.pattern.permute.xlu0 0
    %123 = vperm.xlu0 %122, %v104
    %v124 = vpop.permute.xlu0 %123
    %125 = vset.pattern.permute.xlu0 0
    %126 = vperm.xlu0 %125, %v105
    %v127 = vpop.permute.xlu0 %126
    %128 = vset.pattern.permute.xlu0 0
    %129 = vperm.xlu0 %128, %v106
    %v130 = vpop.permute.xlu0 %129
    %131 = vset.pattern.permute.xlu0 0
    %132 = vperm.xlu0 %131, %v107
    %v133 = vpop.permute.xlu0 %132
    %vm134 = vcmp.eq.s32.totalorder %v109, %v112
    %vm135 = vcmp.eq.s32.totalorder %v109, %v115
    %vm136 = vcmp.eq.s32.totalorder %v109, %v118
    %vm137 = vcmp.eq.s32.totalorder %v109, %v121
    %vm138 = vcmp.eq.s32.totalorder %v109, %v124
    %vm139 = vcmp.eq.s32.totalorder %v109, %v127
    %vm140 = vcmp.eq.s32.totalorder %v109, %v130
    %vm141 = vcmp.eq.s32.totalorder %v109, %v133
    %v142 = vsel %vm134, 1.0, 0.0
    %v143 = vsel %vm135, 1.0, 0.0
    %v144 = vsel %vm136, 1.0, 0.0
    %v145 = vsel %vm137, 1.0, 0.0
    %v146 = vsel %vm138, 1.0, 0.0
    %v147 = vsel %vm139, 1.0, 0.0
    %v148 = vsel %vm140, 1.0, 0.0
    %v149 = vsel %vm141, 1.0, 0.0
    %v150 = vld [vmem:[%s1] sm:$0xff]
    %v151 = vld [vmem:[%s1 + $0x8] sm:$0xff]
    %v152 = vld [vmem:[%s1 + $0x10] sm:$0xff]
    %v153 = vld [vmem:[%s1 + $0x18] sm:$0xff]
    %v154 = vld [vmem:[%s1 + $0x20] sm:$0xff]
    %v155 = vld [vmem:[%s1 + $0x28] sm:$0xff]
    %v156 = vld [vmem:[%s1 + $0x30] sm:$0xff]
    %v157 = vld [vmem:[%s1 + $0x38] sm:$0xff]
    %v158 = vld [vmem:[%s2] sm:$0x1]
    %v160 = vperm.slane %v158, 0
    %vm162 = vcmask 523264
    %v164 = vsel %vm162, %v142, 0
    %v167 = vsel %vm162, %v143, 0
    %v170 = vsel %vm162, %v144, 0
    %v173 = vsel %vm162, %v145, 0
    %v176 = vsel %vm162, %v146, 0
    %v179 = vsel %vm162, %v147, 0
    %v182 = vsel %vm162, %v148, 0
    %v185 = vsel %vm162, %v149, 0
    %187 = vmatpush.msra.mxu0 0.0
    %188 = vmatpush.msra.mxu0 0.0
    %189 = vmatpush.msra.mxu0 0.0
    %190 = vmatpush.msra.mxu0 0.0
    %191 = vmatpush.msra.mxu0 0.0
    %192 = vmatpush.msra.mxu0 0.0
    %193 = vmatpush.msra.mxu0 0.0
    %194 = vmatpush.msra.mxu0 0.0
    %195 = vmatpush.msra.mxu0 %v157
    %196 = vmatpush.msra.mxu0 %v156
    %197 = vmatpush.msra.mxu0 %v155
    %198 = vmatpush.msra.mxu0 %v154
    %199 = vmatpush.msra.mxu0 %v153
    %200 = vmatpush.msra.mxu0 %v152
    %201 = vmatpush.msra.mxu0 %v151
    %202 = vmatpush.msra.mxu0 %v150
    %203 = vmatmul.f32.gmra.mxu0 %v164
    %v204 = vpop.f32.mrf.mxu0
    %v205 = vadd.f32 %v160, %v204
    %206 = vmatmul.f32.gmra.mxu0 %v167
    %v207 = vpop.f32.mrf.mxu0
    %v208 = vadd.f32 %v160, %v207
    %209 = vmatmul.f32.gmra.mxu0 %v170
    %v210 = vpop.f32.mrf.mxu0
    %v211 = vadd.f32 %v160, %v210
    %212 = vmatmul.f32.gmra.mxu0 %v173
    %v213 = vpop.f32.mrf.mxu0
    %v214 = vadd.f32 %v160, %v213
    %215 = vmatmul.f32.gmra.mxu0 %v176
    %v216 = vpop.f32.mrf.mxu0
    %v217 = vadd.f32 %v160, %v216
    %218 = vmatmul.f32.gmra.mxu0 %v179
    %v219 = vpop.f32.mrf.mxu0
    %v220 = vadd.f32 %v160, %v219
    %221 = vmatmul.f32.gmra.mxu0 %v182
    %v222 = vpop.f32.mrf.mxu0
    %v223 = vadd.f32 %v160, %v222
    %224 = vmatmul.f32.gmra.mxu0 %v185
    %v225 = vpop.f32.mrf.mxu0
    %v226 = vadd.f32 %v160, %v225
    %227 = vdwg.mxu0
    %228 = vst [vmem:[#allocation2] sm:$0xff] %v205
    %229 = vst [vmem:[#allocation2 + $0x8] sm:$0xff] %v208
    %230 = vst [vmem:[#allocation2 + $0x10] sm:$0xff] %v211
    %231 = vst [vmem:[#allocation2 + $0x18] sm:$0xff] %v214
    %232 = vst [vmem:[#allocation2 + $0x20] sm:$0xff] %v217
    %233 = vst [vmem:[#allocation2 + $0x28] sm:$0xff] %v220
    %234 = vst [vmem:[#allocation2 + $0x30] sm:$0xff] %v223
    %235 = vst [vmem:[#allocation2 + $0x38] sm:$0xff] %v226
    %v236 = vld [vmem:[#allocation4] sm:$0xff]
    %v237 = vld [vmem:[#allocation4 + $0x8] sm:$0xff]
    %v238 = vld [vmem:[#allocation4 + $0x10] sm:$0xff]
    %v239 = vld [vmem:[#allocation4 + $0x18] sm:$0xff]
    %v240 = vld [vmem:[#allocation4 + $0x20] sm:$0xff]
    %v241 = vld [vmem:[#allocation4 + $0x28] sm:$0xff]
    %v242 = vld [vmem:[#allocation4 + $0x30] sm:$0xff]
    %v243 = vld [vmem:[#allocation4 + $0x38] sm:$0xff]
    %v244 = vld [vmem:[#allocation4 + $0x40] sm:$0xff]
    %v245 = vld [vmem:[#allocation4 + $0x48] sm:$0xff]
    %v246 = vld [vmem:[#allocation4 + $0x50] sm:$0xff]
    %v247 = vld [vmem:[#allocation4 + $0x58] sm:$0xff]
    %v248 = vld [vmem:[#allocation4 + $0x60] sm:$0xff]
    %v249 = vld [vmem:[#allocation4 + $0x68] sm:$0xff]
    %v250 = vld [vmem:[#allocation4 + $0x70] sm:$0xff]
    %v251 = vld [vmem:[#allocation4 + $0x78] sm:$0xff]
    %v252 = vld [vmem:[%s4] sm:$0x1]
    %v254 = vperm.slane %v252, 0
    %vm256 = vcmp.ge.s32.totalorder %v109, 64
    %vm257 = vcmp.lt.s32.totalorder %v109, 96
    %vm258 = vmand %vm256, %vm257
    %v259 = vsel %vm258, 2.0, 1.0
    %v260 = vsel %vm258, 1.0, 0.0
    %v261 = vld [vmem:[#allocation9] sm:$0xff]
    %v262 = vld [vmem:[#allocation10] sm:$0xff]
    %s263 = scalar_lea.vmem [#allocation9], 8
    %v264 = vld [vmem:[%s263] sm:$0xff]
    %s265 = scalar_lea.vmem [#allocation10], 8
    %v266 = vld [vmem:[%s265] sm:$0xff]
    %v267 = vld [vmem:[#allocation4 + $0x8] sm:$0xff]
    %v268 = vld [vmem:[#allocation4 + $0x18] sm:$0xff]
    %v269 = vld [vmem:[#allocation4 + $0x28] sm:$0xff]
    %v270 = vld [vmem:[#allocation4 + $0x38] sm:$0xff]
    %vm271 = vcmask 261120
    %v273 = vsel %vm271, %v261, 0
    %275 = vmatpush.msra.mxu0 0.0
    %276 = vmatpush.msra.mxu0 0.0
    %277 = vmatpush.msra.mxu0 0.0
    %278 = vmatpush.msra.mxu0 0.0
    %279 = vmatpush.msra.mxu0 0.0
    %280 = vmatpush.msra.mxu0 0.0
    %281 = vmatpush.msra.mxu0 0.0
    %282 = vmatpush.msra.mxu0 0.0
    %283 = vmatpush.msra.mxu0 0.0
    %284 = vmatpush.msra.mxu0 0.0
    %285 = vmatpush.msra.mxu0 0.0
    %286 = vmatpush.msra.mxu0 0.0
    %287 = vmatpush.msra.mxu0 %v270
    %288 = vmatpush.msra.mxu0 %v269
    %289 = vmatpush.msra.mxu0 %v268
    %290 = vmatpush.msra.mxu0 %v267
    %291 = vmatmul.f32.gmra.mxu0 %v273
    %v292 = vpop.f32.mrf.mxu0
    %v293 = vadd.f32 0.0, %v292
    %294 = vdwg.mxu0
    %v295 = vld [vmem:[#allocation2] sm:$0xff]
    %v296 = vadd.f32 %v295, %v293
    %v297 = vmul.f32 %v296, %v259
    %v298 = vxor.u32 %v297, 2147483648
    %v299 = vmul.f32 %v298, 1.442695
    %v300 = vpow.pop %v299
    %v301 = vadd.f32 %v300, 1.0
    %v302 = vrcp.pop %v301
    %v303 = vmul.f32 %v301, %v302
    %v304 = vsub.f32 1.0, %v303
    %v305 = vmul.f32 %v302, %v304
    %v306 = vadd.f32 %v302, %v305
    %vm307 = vweird.f32 %v301
    %vm308 = vweird.f32 %v302
    %vm309 = vmor %vm307, %vm308
    %v310 = vsel %vm309, %v302, %v306
    %v311 = vand.u32 2147483647, %v301
    %vm312 = vcmp.eq.f32.partialorder %v311, 8.507059e+37
    %v313 = vand.u32 %v301, 2147483648
    %v314 = vor.u32 1.1754944e-38, %v313
    %v315 = vsel %vm312, %v314, %v310
    %v316 = vmul.f32 1.0, %v315
    %v317 = vmul.f32 %v316, %v259
    %v318 = vsub.f32 %v317, %v260
    %320 = vrot.lane.b32.xlu0 %v262, 32
    %v321 = vpop.permute.xlu0 %320
    %v323 = vmul.f32 %v318, %v321
    %325 = vrot.lane.b32.xlu0 %v318, 64
    %v326 = vpop.permute.xlu0 %325
    %v328 = vmul.f32 %v318, %v326
    %330 = vrot.lane.b32.xlu0 %v328, 32
    %v331 = vpop.permute.xlu0 %330
    %v333 = vadd.f32 %v323, %v331
    %v334 = vtanh.pop %v333
    %336 = vrot.lane.b32.xlu0 %v334, 64
    %v337 = vpop.permute.xlu0 %336
    %v339 = vmul.f32 %v318, %v337
    %341 = vrot.lane.b32.xlu0 %v339, 32
    %v342 = vpop.permute.xlu0 %341
    %345 = vrot.lane.b32.xlu0 %v264, 32
    %v346 = vpop.permute.xlu0 %345
    %v348 = vsel %vm271, %v342, %v346
    %v350 = vsel %vm162, %v348, 0
    %352 = vmatpush.msra.mxu0 0.0
    %353 = vmatpush.msra.mxu0 0.0
    %354 = vmatpush.msra.mxu0 0.0
    %355 = vmatpush.msra.mxu0 0.0
    %356 = vmatpush.msra.mxu0 0.0
    %357 = vmatpush.msra.mxu0 0.0
    %358 = vmatpush.msra.mxu0 0.0
    %359 = vmatpush.msra.mxu0 0.0
    %360 = vmatpush.msra.mxu0 %v250
    %361 = vmatpush.msra.mxu0 %v248
    %362 = vmatpush.msra.mxu0 %v246
    %363 = vmatpush.msra.mxu0 %v244
    %364 = vmatpush.msra.mxu0 %v242
    %365 = vmatpush.msra.mxu0 %v240
    %366 = vmatpush.msra.mxu0 %v238
    %367 = vmatpush.msra.mxu0 %v236
    %368 = vmatmul.f32.gmra.mxu0 %v350
    %v369 = vpop.f32.mrf.mxu0
    %v370 = vadd.f32 0.0, %v369
    %371 = vdwg.mxu0
    %372 = vmatpush.msra.mxu0 0.0
    %373 = vmatpush.msra.mxu0 0.0
    %374 = vmatpush.msra.mxu0 0.0
    %375 = vmatpush.msra.mxu0 0.0
    %376 = vmatpush.msra.mxu0 0.0
    %377 = vmatpush.msra.mxu0 0.0
    %378 = vmatpush.msra.mxu0 0.0
    %379 = vmatpush.msra.mxu0 0.0
    %380 = vmatpush.msra.mxu0 %v251
    %381 = vmatpush.msra.mxu0 %v249
    %382 = vmatpush.msra.mxu0 %v247
    %383 = vmatpush.msra.mxu0 %v245
    %384 = vmatpush.msra.mxu0 %v243
    %385 = vmatpush.msra.mxu0 %v241
    %386 = vmatpush.msra.mxu0 %v239
    %387 = vmatpush.msra.mxu0 %v237
    %388 = vmatmul.f32.gmra.mxu0 %v350
    %v389 = vpop.f32.mrf.mxu0
    %v390 = vadd.f32 0.0, %v389
    %391 = vdwg.mxu0
    %v392 = vadd.f32 %v370, %v254
    %v393 = vmul.f32 %v392, %v259
    %v394 = vxor.u32 %v393, 2147483648
    %v395 = vmul.f32 %v394, 1.442695
    %v396 = vpow.pop %v395
    %v397 = vadd.f32 %v396, 1.0
    %v398 = vrcp.pop %v397
    %v399 = vmul.f32 %v397, %v398
    %v400 = vsub.f32 1.0, %v399
    %v401 = vmul.f32 %v398, %v400
    %v402 = vadd.f32 %v398, %v401
    %vm403 = vweird.f32 %v397
    %vm404 = vweird.f32 %v398
    %vm405 = vmor %vm403, %vm404
    %v406 = vsel %vm405, %v398, %v402
    %v407 = vand.u32 2147483647, %v397
    %vm408 = vcmp.eq.f32.partialorder %v407, 8.507059e+37
    %v409 = vand.u32 %v397, 2147483648
    %v410 = vor.u32 1.1754944e-38, %v409
    %v411 = vsel %vm408, %v410, %v406
    %v412 = vmul.f32 1.0, %v411
    %v413 = vmul.f32 %v412, %v259
    %v414 = vsub.f32 %v413, %v260
    %416 = vrot.lane.b32.xlu0 %v266, 32
    %v417 = vpop.permute.xlu0 %416
    %v419 = vmul.f32 %v414, %v417
    %421 = vrot.lane.b32.xlu0 %v414, 64
    %v422 = vpop.permute.xlu0 %421
    %v424 = vmul.f32 %v414, %v422
    %426 = vrot.lane.b32.xlu0 %v424, 32
    %v427 = vpop.permute.xlu0 %426
    %v429 = vadd.f32 %v419, %v427
    %v430 = vtanh.pop %v429
    %432 = vrot.lane.b32.xlu0 %v430, 64
    %v433 = vpop.permute.xlu0 %432
    %v435 = vmul.f32 %v414, %v433
    %437 = vrot.lane.b32.xlu0 %v435, 32
    %v438 = vpop.permute.xlu0 %437
    %440 = vst.msk [vmem:[#allocation3] sm:$0xff] %vm271, %v438
    %v441 = vld [vmem:[#allocation2 + $0x8] sm:$0xff]
    %v442 = vadd.f32 %v441, %v390
    %v443 = vmul.f32 %v442, %v259
    %v444 = vxor.u32 %v443, 2147483648
    %v445 = vmul.f32 %v444, 1.442695
    %v446 = vpow.pop %v445
    %v447 = vadd.f32 %v446, 1.0
    %v448 = vrcp.pop %v447
    %v449 = vmul.f32 %v447, %v448
    %v450 = vsub.f32 1.0, %v449
    %v451 = vmul.f32 %v448, %v450
    %v452 = vadd.f32 %v448, %v451
    %vm453 = vweird.f32 %v447
    %vm454 = vweird.f32 %v448
    %vm455 = vmor %vm453, %vm454
    %v456 = vsel %vm455, %v448, %v452
    %v457 = vand.u32 2147483647, %v447
    %vm458 = vcmp.eq.f32.partialorder %v457, 8.507059e+37
    %v459 = vand.u32 %v447, 2147483648
    %v460 = vor.u32 1.1754944e-38, %v459
    %v461 = vsel %vm458, %v460, %v456
    %v462 = vmul.f32 1.0, %v461
    %v463 = vmul.f32 %v462, %v259
    %v464 = vsub.f32 %v463, %v260
    %v465 = vmul.f32 %v464, %v333
    %467 = vrot.lane.b32.xlu0 %v464, 64
    %v468 = vpop.permute.xlu0 %467
    %v470 = vmul.f32 %v464, %v468
    %472 = vrot.lane.b32.xlu0 %v470, 32
    %v473 = vpop.permute.xlu0 %472
    %v475 = vadd.f32 %v465, %v473
    %v476 = vtanh.pop %v475
    %478 = vrot.lane.b32.xlu0 %v476, 64
    %v479 = vpop.permute.xlu0 %478
    %v481 = vmul.f32 %v464, %v479
    %483 = vrot.lane.b32.xlu0 %v481, 32
    %v484 = vpop.permute.xlu0 %483
    %486 = vrot.lane.b32.xlu0 %v435, 64
    %v487 = vpop.permute.xlu0 %486
    %v489 = vsel %vm271, %v484, %v487
    %v491 = vsel %vm162, %v489, 0
    %493 = vmatpush.msra.mxu0 0.0
    %494 = vmatpush.msra.mxu0 0.0
    %495 = vmatpush.msra.mxu0 0.0
    %496 = vmatpush.msra.mxu0 0.0
    %497 = vmatpush.msra.mxu0 0.0
    %498 = vmatpush.msra.mxu0 0.0
    %499 = vmatpush.msra.mxu0 0.0
    %500 = vmatpush.msra.mxu0 0.0
    %501 = vmatpush.msra.mxu0 %v250
    %502 = vmatpush.msra.mxu0 %v248
    %503 = vmatpush.msra.mxu0 %v246
    %504 = vmatpush.msra.mxu0 %v244
    %505 = vmatpush.msra.mxu0 %v242
    %506 = vmatpush.msra.mxu0 %v240
    %507 = vmatpush.msra.mxu0 %v238
    %508 = vmatpush.msra.mxu0 %v236
    %509 = vmatmul.f32.gmra.mxu0 %v491
    %v510 = vpop.f32.mrf.mxu0
    %v511 = vadd.f32 0.0, %v510
    %512 = vdwg.mxu0
    %513 = vmatpush.msra.mxu0 0.0
    %514 = vmatpush.msra.mxu0 0.0
    %515 = vmatpush.msra.mxu0 0.0
    %516 = vmatpush.msra.mxu0 0.0
    %517 = vmatpush.msra.mxu0 0.0
    %518 = vmatpush.msra.mxu0 0.0
    %519 = vmatpush.msra.mxu0 0.0
    %520 = vmatpush.msra.mxu0 0.0
    %521 = vmatpush.msra.mxu0 %v251
    %522 = vmatpush.msra.mxu0 %v249
    %523 = vmatpush.msra.mxu0 %v247
    %524 = vmatpush.msra.mxu0 %v245
    %525 = vmatpush.msra.mxu0 %v243
    %526 = vmatpush.msra.mxu0 %v241
    %527 = vmatpush.msra.mxu0 %v239
    %528 = vmatpush.msra.mxu0 %v237
    %529 = vmatmul.f32.gmra.mxu0 %v491
    %v530 = vpop.f32.mrf.mxu0
    %v531 = vadd.f32 0.0, %v530
    %532 = vdwg.mxu0
    %v533 = vadd.f32 %v511, %v254
    %v534 = vmul.f32 %v533, %v259
    %v535 = vxor.u32 %v534, 2147483648
    %v536 = vmul.f32 %v535, 1.442695
    %v537 = vpow.pop %v536
    %v538 = vadd.f32 %v537, 1.0
    %v539 = vrcp.pop %v538
    %v540 = vmul.f32 %v538, %v539
    %v541 = vsub.f32 1.0, %v540
    %v542 = vmul.f32 %v539, %v541
    %v543 = vadd.f32 %v539, %v542
    %vm544 = vweird.f32 %v538
    %vm545 = vweird.f32 %v539
    %vm546 = vmor %vm544, %vm545
    %v547 = vsel %vm546, %v539, %v543
    %v548 = vand.u32 2147483647, %v538
    %vm549 = vcmp.eq.f32.partialorder %v548, 8.507059e+37
    %v550 = vand.u32 %v538, 2147483648
    %v551 = vor.u32 1.1754944e-38, %v550
    %v552 = vsel %vm549, %v551, %v547
    %v553 = vmul.f32 1.0, %v552
    %v554 = vmul.f32 %v553, %v259
    %v555 = vsub.f32 %v554, %v260
    %v556 = vmul.f32 %v555, %v429
    %558 = vrot.lane.b32.xlu0 %v555, 64
    %v559 = vpop.permute.xlu0 %558
    %v561 = vmul.f32 %v555, %v559
    %563 = vrot.lane.b32.xlu0 %v561, 32
    %v564 = vpop.permute.xlu0 %563
    %v566 = vadd.f32 %v556, %v564
    %v567 = vtanh.pop %v566
    %569 = vrot.lane.b32.xlu0 %v567, 64
    %v570 = vpop.permute.xlu0 %569
    %v572 = vmul.f32 %v555, %v570
    %574 = vrot.lane.b32.xlu0 %v572, 32
    %v575 = vpop.permute.xlu0 %574
    %577 = vst.msk [vmem:[#allocation3 + $0x8] sm:$0xff] %vm271, %v575
    %v578 = vld [vmem:[#allocation2 + $0x10] sm:$0xff]
    %v579 = vadd.f32 %v578, %v531
    %v580 = vmul.f32 %v579, %v259
    %v581 = vxor.u32 %v580, 2147483648
    %v582 = vmul.f32 %v581, 1.442695
    %v583 = vpow.pop %v582
    %v584 = vadd.f32 %v583, 1.0
    %v585 = vrcp.pop %v584
    %v586 = vmul.f32 %v584, %v585
    %v587 = vsub.f32 1.0, %v586
    %v588 = vmul.f32 %v585, %v587
    %v589 = vadd.f32 %v585, %v588
    %vm590 = vweird.f32 %v584
    %vm591 = vweird.f32 %v585
    %vm592 = vmor %vm590, %vm591
    %v593 = vsel %vm592, %v585, %v589
    %v594 = vand.u32 2147483647, %v584
    %vm595 = vcmp.eq.f32.partialorder %v594, 8.507059e+37
    %v596 = vand.u32 %v584, 2147483648
    %v597 = vor.u32 1.1754944e-38, %v596
    %v598 = vsel %vm595, %v597, %v593
    %v599 = vmul.f32 1.0, %v598
    %v600 = vmul.f32 %v599, %v259
    %v601 = vsub.f32 %v600, %v260
    %v602 = vmul.f32 %v601, %v475
    %604 = vrot.lane.b32.xlu0 %v601, 64
    %v605 = vpop.permute.xlu0 %604
    %v607 = vmul.f32 %v601, %v605
    %609 = vrot.lane.b32.xlu0 %v607, 32
    %v610 = vpop.permute.xlu0 %609
    %v612 = vadd.f32 %v602, %v610
    %v613 = vtanh.pop %v612
    %615 = vrot.lane.b32.xlu0 %v613, 64
    %v616 = vpop.permute.xlu0 %615
    %v618 = vmul.f32 %v601, %v616
    %620 = vrot.lane.b32.xlu0 %v618, 32
    %v621 = vpop.permute.xlu0 %620
    %623 = vrot.lane.b32.xlu0 %v572, 64
    %v624 = vpop.permute.xlu0 %623
    %v626 = vsel %vm271, %v621, %v624
    %v628 = vsel %vm162, %v626, 0
    %630 = vmatpush.msra.mxu0 0.0
    %631 = vmatpush.msra.mxu0 0.0
    %632 = vmatpush.msra.mxu0 0.0
    %633 = vmatpush.msra.mxu0 0.0
    %634 = vmatpush.msra.mxu0 0.0
    %635 = vmatpush.msra.mxu0 0.0
    %636 = vmatpush.msra.mxu0 0.0
    %637 = vmatpush.msra.mxu0 0.0
    %638 = vmatpush.msra.mxu0 %v250
    %639 = vmatpush.msra.mxu0 %v248
    %640 = vmatpush.msra.mxu0 %v246
    %641 = vmatpush.msra.mxu0 %v244
    %642 = vmatpush.msra.mxu0 %v242
    %643 = vmatpush.msra.mxu0 %v240
    %644 = vmatpush.msra.mxu0 %v238
    %645 = vmatpush.msra.mxu0 %v236
    %646 = vmatmul.f32.gmra.mxu0 %v628
    %v647 = vpop.f32.mrf.mxu0
    %v648 = vadd.f32 0.0, %v647
    %649 = vdwg.mxu0
    %650 = vmatpush.msra.mxu0 0.0
    %651 = vmatpush.msra.mxu0 0.0
    %652 = vmatpush.msra.mxu0 0.0
    %653 = vmatpush.msra.mxu0 0.0
    %654 = vmatpush.msra.mxu0 0.0
    %655 = vmatpush.msra.mxu0 0.0
    %656 = vmatpush.msra.mxu0 0.0
    %657 = vmatpush.msra.mxu0 0.0
    %658 = vmatpush.msra.mxu0 %v251
    %659 = vmatpush.msra.mxu0 %v249
    %660 = vmatpush.msra.mxu0 %v247
    %661 = vmatpush.msra.mxu0 %v245
    %662 = vmatpush.msra.mxu0 %v243
    %663 = vmatpush.msra.mxu0 %v241
    %664 = vmatpush.msra.mxu0 %v239
    %665 = vmatpush.msra.mxu0 %v237
    %666 = vmatmul.f32.gmra.mxu0 %v628
    %v667 = vpop.f32.mrf.mxu0
    %v668 = vadd.f32 0.0, %v667
    %669 = vdwg.mxu0
    %v670 = vadd.f32 %v648, %v254
    %v671 = vmul.f32 %v670, %v259
    %v672 = vxor.u32 %v671, 2147483648
    %v673 = vmul.f32 %v672, 1.442695
    %v674 = vpow.pop %v673
    %v675 = vadd.f32 %v674, 1.0
    %v676 = vrcp.pop %v675
    %v677 = vmul.f32 %v675, %v676
    %v678 = vsub.f32 1.0, %v677
    %v679 = vmul.f32 %v676, %v678
    %v680 = vadd.f32 %v676, %v679
    %vm681 = vweird.f32 %v675
    %vm682 = vweird.f32 %v676
    %vm683 = vmor %vm681, %vm682
    %v684 = vsel %vm683, %v676, %v680
    %v685 = vand.u32 2147483647, %v675
    %vm686 = vcmp.eq.f32.partialorder %v685, 8.507059e+37
    %v687 = vand.u32 %v675, 2147483648
    %v688 = vor.u32 1.1754944e-38, %v687
    %v689 = vsel %vm686, %v688, %v684
    %v690 = vmul.f32 1.0, %v689
    %v691 = vmul.f32 %v690, %v259
    %v692 = vsub.f32 %v691, %v260
    %v693 = vmul.f32 %v692, %v566
    %695 = vrot.lane.b32.xlu0 %v692, 64
    %v696 = vpop.permute.xlu0 %695
    %v698 = vmul.f32 %v692, %v696
    %700 = vrot.lane.b32.xlu0 %v698, 32
    %v701 = vpop.permute.xlu0 %700
    %v703 = vadd.f32 %v693, %v701
    %v704 = vtanh.pop %v703
    %706 = vrot.lane.b32.xlu0 %v704, 64
    %v707 = vpop.permute.xlu0 %706
    %v709 = vmul.f32 %v692, %v707
    %711 = vrot.lane.b32.xlu0 %v709, 32
    %v712 = vpop.permute.xlu0 %711
    %714 = vst.msk [vmem:[#allocation3 + $0x10] sm:$0xff] %vm271, %v712
    %v715 = vld [vmem:[#allocation2 + $0x18] sm:$0xff]
    %v716 = vadd.f32 %v715, %v668
    %v717 = vmul.f32 %v716, %v259
    %v718 = vxor.u32 %v717, 2147483648
    %v719 = vmul.f32 %v718, 1.442695
    %v720 = vpow.pop %v719
    %v721 = vadd.f32 %v720, 1.0
    %v722 = vrcp.pop %v721
    %v723 = vmul.f32 %v721, %v722
    %v724 = vsub.f32 1.0, %v723
    %v725 = vmul.f32 %v722, %v724
    %v726 = vadd.f32 %v722, %v725
    %vm727 = vweird.f32 %v721
    %vm728 = vweird.f32 %v722
    %vm729 = vmor %vm727, %vm728
    %v730 = vsel %vm729, %v722, %v726
    %v731 = vand.u32 2147483647, %v721
    %vm732 = vcmp.eq.f32.partialorder %v731, 8.507059e+37
    %v733 = vand.u32 %v721, 2147483648
    %v734 = vor.u32 1.1754944e-38, %v733
    %v735 = vsel %vm732, %v734, %v730
    %v736 = vmul.f32 1.0, %v735
    %v737 = vmul.f32 %v736, %v259
    %v738 = vsub.f32 %v737, %v260
    %v739 = vmul.f32 %v738, %v612
    %741 = vrot.lane.b32.xlu0 %v738, 64
    %v742 = vpop.permute.xlu0 %741
    %v744 = vmul.f32 %v738, %v742
    %746 = vrot.lane.b32.xlu0 %v744, 32
    %v747 = vpop.permute.xlu0 %746
    %v749 = vadd.f32 %v739, %v747
    %v750 = vtanh.pop %v749
    %752 = vrot.lane.b32.xlu0 %v750, 64
    %v753 = vpop.permute.xlu0 %752
    %v755 = vmul.f32 %v738, %v753
    %757 = vrot.lane.b32.xlu0 %v755, 32
    %v758 = vpop.permute.xlu0 %757
    %760 = vrot.lane.b32.xlu0 %v709, 64
    %v761 = vpop.permute.xlu0 %760
    %v763 = vsel %vm271, %v758, %v761
    %v765 = vsel %vm162, %v763, 0
    %767 = vmatpush.msra.mxu0 0.0
    %768 = vmatpush.msra.mxu0 0.0
    %769 = vmatpush.msra.mxu0 0.0
    %770 = vmatpush.msra.mxu0 0.0
    %771 = vmatpush.msra.mxu0 0.0
    %772 = vmatpush.msra.mxu0 0.0
    %773 = vmatpush.msra.mxu0 0.0
    %774 = vmatpush.msra.mxu0 0.0
    %775 = vmatpush.msra.mxu0 %v250
    %776 = vmatpush.msra.mxu0 %v248
    %777 = vmatpush.msra.mxu0 %v246
    %778 = vmatpush.msra.mxu0 %v244
    %779 = vmatpush.msra.mxu0 %v242
    %780 = vmatpush.msra.mxu0 %v240
    %781 = vmatpush.msra.mxu0 %v238
    %782 = vmatpush.msra.mxu0 %v236
    %783 = vmatmul.f32.gmra.mxu0 %v765
    %v784 = vpop.f32.mrf.mxu0
    %v785 = vadd.f32 0.0, %v784
    %786 = vdwg.mxu0
    %787 = vmatpush.msra.mxu0 0.0
    %788 = vmatpush.msra.mxu0 0.0
    %789 = vmatpush.msra.mxu0 0.0
    %790 = vmatpush.msra.mxu0 0.0
    %791 = vmatpush.msra.mxu0 0.0
    %792 = vmatpush.msra.mxu0 0.0
    %793 = vmatpush.msra.mxu0 0.0
    %794 = vmatpush.msra.mxu0 0.0
    %795 = vmatpush.msra.mxu0 %v251
    %796 = vmatpush.msra.mxu0 %v249
    %797 = vmatpush.msra.mxu0 %v247
    %798 = vmatpush.msra.mxu0 %v245
    %799 = vmatpush.msra.mxu0 %v243
    %800 = vmatpush.msra.mxu0 %v241
    %801 = vmatpush.msra.mxu0 %v239
    %802 = vmatpush.msra.mxu0 %v237
    %803 = vmatmul.f32.gmra.mxu0 %v765
    %v804 = vpop.f32.mrf.mxu0
    %v805 = vadd.f32 0.0, %v804
    %806 = vdwg.mxu0
    %v807 = vadd.f32 %v785, %v254
    %v808 = vmul.f32 %v807, %v259
    %v809 = vxor.u32 %v808, 2147483648
    %v810 = vmul.f32 %v809, 1.442695
    %v811 = vpow.pop %v810
    %v812 = vadd.f32 %v811, 1.0
    %v813 = vrcp.pop %v812
    %v814 = vmul.f32 %v812, %v813
    %v815 = vsub.f32 1.0, %v814
    %v816 = vmul.f32 %v813, %v815
    %v817 = vadd.f32 %v813, %v816
    %vm818 = vweird.f32 %v812
    %vm819 = vweird.f32 %v813
    %vm820 = vmor %vm818, %vm819
    %v821 = vsel %vm820, %v813, %v817
    %v822 = vand.u32 2147483647, %v812
    %vm823 = vcmp.eq.f32.partialorder %v822, 8.507059e+37
    %v824 = vand.u32 %v812, 2147483648
    %v825 = vor.u32 1.1754944e-38, %v824
    %v826 = vsel %vm823, %v825, %v821
    %v827 = vmul.f32 1.0, %v826
    %v828 = vmul.f32 %v827, %v259
    %v829 = vsub.f32 %v828, %v260
    %v830 = vmul.f32 %v829, %v703
    %832 = vrot.lane.b32.xlu0 %v829, 64
    %v833 = vpop.permute.xlu0 %832
    %v835 = vmul.f32 %v829, %v833
    %837 = vrot.lane.b32.xlu0 %v835, 32
    %v838 = vpop.permute.xlu0 %837
    %v840 = vadd.f32 %v830, %v838
    %v841 = vtanh.pop %v840
    %843 = vrot.lane.b32.xlu0 %v841, 64
    %v844 = vpop.permute.xlu0 %843
    %v846 = vmul.f32 %v829, %v844
    %848 = vrot.lane.b32.xlu0 %v846, 32
    %v849 = vpop.permute.xlu0 %848
    %851 = vst.msk [vmem:[#allocation3 + $0x18] sm:$0xff] %vm271, %v849
    %v852 = vld [vmem:[#allocation2 + $0x20] sm:$0xff]
    %v853 = vadd.f32 %v852, %v805
    %v854 = vmul.f32 %v853, %v259
    %v855 = vxor.u32 %v854, 2147483648
    %v856 = vmul.f32 %v855, 1.442695
    %v857 = vpow.pop %v856
    %v858 = vadd.f32 %v857, 1.0
    %v859 = vrcp.pop %v858
    %v860 = vmul.f32 %v858, %v859
    %v861 = vsub.f32 1.0, %v860
    %v862 = vmul.f32 %v859, %v861
    %v863 = vadd.f32 %v859, %v862
    %vm864 = vweird.f32 %v858
    %vm865 = vweird.f32 %v859
    %vm866 = vmor %vm864, %vm865
    %v867 = vsel %vm866, %v859, %v863
    %v868 = vand.u32 2147483647, %v858
    %vm869 = vcmp.eq.f32.partialorder %v868, 8.507059e+37
    %v870 = vand.u32 %v858, 2147483648
    %v871 = vor.u32 1.1754944e-38, %v870
    %v872 = vsel %vm869, %v871, %v867
    %v873 = vmul.f32 1.0, %v872
    %v874 = vmul.f32 %v873, %v259
    %v875 = vsub.f32 %v874, %v260
    %v876 = vmul.f32 %v875, %v749
    %878 = vrot.lane.b32.xlu0 %v875, 64
    %v879 = vpop.permute.xlu0 %878
    %v881 = vmul.f32 %v875, %v879
    %883 = vrot.lane.b32.xlu0 %v881, 32
    %v884 = vpop.permute.xlu0 %883
    %v886 = vadd.f32 %v876, %v884
    %v887 = vtanh.pop %v886
    %889 = vrot.lane.b32.xlu0 %v887, 64
    %v890 = vpop.permute.xlu0 %889
    %v892 = vmul.f32 %v875, %v890
    %894 = vrot.lane.b32.xlu0 %v892, 32
    %v895 = vpop.permute.xlu0 %894
    %897 = vrot.lane.b32.xlu0 %v846, 64
    %v898 = vpop.permute.xlu0 %897
    %v900 = vsel %vm271, %v895, %v898
    %v902 = vsel %vm162, %v900, 0
    %904 = vmatpush.msra.mxu0 0.0
    %905 = vmatpush.msra.mxu0 0.0
    %906 = vmatpush.msra.mxu0 0.0
    %907 = vmatpush.msra.mxu0 0.0
    %908 = vmatpush.msra.mxu0 0.0
    %909 = vmatpush.msra.mxu0 0.0
    %910 = vmatpush.msra.mxu0 0.0
    %911 = vmatpush.msra.mxu0 0.0
    %912 = vmatpush.msra.mxu0 %v250
    %913 = vmatpush.msra.mxu0 %v248
    %914 = vmatpush.msra.mxu0 %v246
    %915 = vmatpush.msra.mxu0 %v244
    %916 = vmatpush.msra.mxu0 %v242
    %917 = vmatpush.msra.mxu0 %v240
    %918 = vmatpush.msra.mxu0 %v238
    %919 = vmatpush.msra.mxu0 %v236
    %920 = vmatmul.f32.gmra.mxu0 %v902
    %v921 = vpop.f32.mrf.mxu0
    %v922 = vadd.f32 0.0, %v921
    %923 = vdwg.mxu0
    %924 = vmatpush.msra.mxu0 0.0
    %925 = vmatpush.msra.mxu0 0.0
    %926 = vmatpush.msra.mxu0 0.0
    %927 = vmatpush.msra.mxu0 0.0
    %928 = vmatpush.msra.mxu0 0.0
    %929 = vmatpush.msra.mxu0 0.0
    %930 = vmatpush.msra.mxu0 0.0
    %931 = vmatpush.msra.mxu0 0.0
    %932 = vmatpush.msra.mxu0 %v251
    %933 = vmatpush.msra.mxu0 %v249
    %934 = vmatpush.msra.mxu0 %v247
    %935 = vmatpush.msra.mxu0 %v245
    %936 = vmatpush.msra.mxu0 %v243
    %937 = vmatpush.msra.mxu0 %v241
    %938 = vmatpush.msra.mxu0 %v239
    %939 = vmatpush.msra.mxu0 %v237
    %940 = vmatmul.f32.gmra.mxu0 %v902
    %v941 = vpop.f32.mrf.mxu0
    %v942 = vadd.f32 0.0, %v941
    %943 = vdwg.mxu0
    %v944 = vadd.f32 %v922, %v254
    %v945 = vmul.f32 %v944, %v259
    %v946 = vxor.u32 %v945, 2147483648
    %v947 = vmul.f32 %v946, 1.442695
    %v948 = vpow.pop %v947
    %v949 = vadd.f32 %v948, 1.0
    %v950 = vrcp.pop %v949
    %v951 = vmul.f32 %v949, %v950
    %v952 = vsub.f32 1.0, %v951
    %v953 = vmul.f32 %v950, %v952
    %v954 = vadd.f32 %v950, %v953
    %vm955 = vweird.f32 %v949
    %vm956 = vweird.f32 %v950
    %vm957 = vmor %vm955, %vm956
    %v958 = vsel %vm957, %v950, %v954
    %v959 = vand.u32 2147483647, %v949
    %vm960 = vcmp.eq.f32.partialorder %v959, 8.507059e+37
    %v961 = vand.u32 %v949, 2147483648
    %v962 = vor.u32 1.1754944e-38, %v961
    %v963 = vsel %vm960, %v962, %v958
    %v964 = vmul.f32 1.0, %v963
    %v965 = vmul.f32 %v964, %v259
    %v966 = vsub.f32 %v965, %v260
    %v967 = vmul.f32 %v966, %v840
    %969 = vrot.lane.b32.xlu0 %v966, 64
    %v970 = vpop.permute.xlu0 %969
    %v972 = vmul.f32 %v966, %v970
    %974 = vrot.lane.b32.xlu0 %v972, 32
    %v975 = vpop.permute.xlu0 %974
    %v977 = vadd.f32 %v967, %v975
    %v978 = vtanh.pop %v977
    %980 = vrot.lane.b32.xlu0 %v978, 64
    %v981 = vpop.permute.xlu0 %980
    %v983 = vmul.f32 %v966, %v981
    %985 = vrot.lane.b32.xlu0 %v983, 32
    %v986 = vpop.permute.xlu0 %985
    %988 = vst.msk [vmem:[#allocation3 + $0x20] sm:$0xff] %vm271, %v986
    %v989 = vld [vmem:[#allocation2 + $0x28] sm:$0xff]
    %v990 = vadd.f32 %v989, %v942
    %v991 = vmul.f32 %v990, %v259
    %v992 = vxor.u32 %v991, 2147483648
    %v993 = vmul.f32 %v992, 1.442695
    %v994 = vpow.pop %v993
    %v995 = vadd.f32 %v994, 1.0
    %v996 = vrcp.pop %v995
    %v997 = vmul.f32 %v995, %v996
    %v998 = vsub.f32 1.0, %v997
    %v999 = vmul.f32 %v996, %v998
    %v1000 = vadd.f32 %v996, %v999
    %vm1001 = vweird.f32 %v995
    %vm1002 = vweird.f32 %v996
    %vm1003 = vmor %vm1001, %vm1002
    %v1004 = vsel %vm1003, %v996, %v1000
    %v1005 = vand.u32 2147483647, %v995
    %vm1006 = vcmp.eq.f32.partialorder %v1005, 8.507059e+37
    %v1007 = vand.u32 %v995, 2147483648
    %v1008 = vor.u32 1.1754944e-38, %v1007
    %v1009 = vsel %vm1006, %v1008, %v1004
    %v1010 = vmul.f32 1.0, %v1009
    %v1011 = vmul.f32 %v1010, %v259
    %v1012 = vsub.f32 %v1011, %v260
    %v1013 = vmul.f32 %v1012, %v886
    %1015 = vrot.lane.b32.xlu0 %v1012, 64
    %v1016 = vpop.permute.xlu0 %1015
    %v1018 = vmul.f32 %v1012, %v1016
    %1020 = vrot.lane.b32.xlu0 %v1018, 32
    %v1021 = vpop.permute.xlu0 %1020
    %v1023 = vadd.f32 %v1013, %v1021
    %v1024 = vtanh.pop %v1023
    %1026 = vrot.lane.b32.xlu0 %v1024, 64
    %v1027 = vpop.permute.xlu0 %1026
    %v1029 = vmul.f32 %v1012, %v1027
    %1031 = vrot.lane.b32.xlu0 %v1029, 32
    %v1032 = vpop.permute.xlu0 %1031
    %1034 = vrot.lane.b32.xlu0 %v983, 64
    %v1035 = vpop.permute.xlu0 %1034
    %v1037 = vsel %vm271, %v1032, %v1035
    %v1039 = vsel %vm162, %v1037, 0
    %1041 = vmatpush.msra.mxu0 0.0
    %1042 = vmatpush.msra.mxu0 0.0
    %1043 = vmatpush.msra.mxu0 0.0
    %1044 = vmatpush.msra.mxu0 0.0
    %1045 = vmatpush.msra.mxu0 0.0
    %1046 = vmatpush.msra.mxu0 0.0
    %1047 = vmatpush.msra.mxu0 0.0
    %1048 = vmatpush.msra.mxu0 0.0
    %1049 = vmatpush.msra.mxu0 %v250
    %1050 = vmatpush.msra.mxu0 %v248
    %1051 = vmatpush.msra.mxu0 %v246
    %1052 = vmatpush.msra.mxu0 %v244
    %1053 = vmatpush.msra.mxu0 %v242
    %1054 = vmatpush.msra.mxu0 %v240
    %1055 = vmatpush.msra.mxu0 %v238
    %1056 = vmatpush.msra.mxu0 %v236
    %1057 = vmatmul.f32.gmra.mxu0 %v1039
    %v1058 = vpop.f32.mrf.mxu0
    %v1059 = vadd.f32 0.0, %v1058
    %1060 = vdwg.mxu0
    %1061 = vmatpush.msra.mxu0 0.0
    %1062 = vmatpush.msra.mxu0 0.0
    %1063 = vmatpush.msra.mxu0 0.0
    %1064 = vmatpush.msra.mxu0 0.0
    %1065 = vmatpush.msra.mxu0 0.0
    %1066 = vmatpush.msra.mxu0 0.0
    %1067 = vmatpush.msra.mxu0 0.0
    %1068 = vmatpush.msra.mxu0 0.0
    %1069 = vmatpush.msra.mxu0 %v251
    %1070 = vmatpush.msra.mxu0 %v249
    %1071 = vmatpush.msra.mxu0 %v247
    %1072 = vmatpush.msra.mxu0 %v245
    %1073 = vmatpush.msra.mxu0 %v243
    %1074 = vmatpush.msra.mxu0 %v241
    %1075 = vmatpush.msra.mxu0 %v239
    %1076 = vmatpush.msra.mxu0 %v237
    %1077 = vmatmul.f32.gmra.mxu0 %v1039
    %v1078 = vpop.f32.mrf.mxu0
    %v1079 = vadd.f32 0.0, %v1078
    %1080 = vdwg.mxu0
    %v1081 = vadd.f32 %v1059, %v254
    %v1082 = vmul.f32 %v1081, %v259
    %v1083 = vxor.u32 %v1082, 2147483648
    %v1084 = vmul.f32 %v1083, 1.442695
    %v1085 = vpow.pop %v1084
    %v1086 = vadd.f32 %v1085, 1.0
    %v1087 = vrcp.pop %v1086
    %v1088 = vmul.f32 %v1086, %v1087
    %v1089 = vsub.f32 1.0, %v1088
    %v1090 = vmul.f32 %v1087, %v1089
    %v1091 = vadd.f32 %v1087, %v1090
    %vm1092 = vweird.f32 %v1086
    %vm1093 = vweird.f32 %v1087
    %vm1094 = vmor %vm1092, %vm1093
    %v1095 = vsel %vm1094, %v1087, %v1091
    %v1096 = vand.u32 2147483647, %v1086
    %vm1097 = vcmp.eq.f32.partialorder %v1096, 8.507059e+37
    %v1098 = vand.u32 %v1086, 2147483648
    %v1099 = vor.u32 1.1754944e-38, %v1098
    %v1100 = vsel %vm1097, %v1099, %v1095
    %v1101 = vmul.f32 1.0, %v1100
    %v1102 = vmul.f32 %v1101, %v259
    %v1103 = vsub.f32 %v1102, %v260
    %v1104 = vmul.f32 %v1103, %v977
    %1106 = vrot.lane.b32.xlu0 %v1103, 64
    %v1107 = vpop.permute.xlu0 %1106
    %v1109 = vmul.f32 %v1103, %v1107
    %1111 = vrot.lane.b32.xlu0 %v1109, 32
    %v1112 = vpop.permute.xlu0 %1111
    %v1114 = vadd.f32 %v1104, %v1112
    %v1115 = vtanh.pop %v1114
    %1117 = vrot.lane.b32.xlu0 %v1115, 64
    %v1118 = vpop.permute.xlu0 %1117
    %v1120 = vmul.f32 %v1103, %v1118
    %1122 = vrot.lane.b32.xlu0 %v1120, 32
    %v1123 = vpop.permute.xlu0 %1122
    %1125 = vst.msk [vmem:[#allocation3 + $0x28] sm:$0xff] %vm271, %v1123
    %v1126 = vld [vmem:[#allocation2 + $0x30] sm:$0xff]
    %v1127 = vadd.f32 %v1126, %v1079
    %v1128 = vmul.f32 %v1127, %v259
    %v1129 = vxor.u32 %v1128, 2147483648
    %v1130 = vmul.f32 %v1129, 1.442695
    %v1131 = vpow.pop %v1130
    %v1132 = vadd.f32 %v1131, 1.0
    %v1133 = vrcp.pop %v1132
    %v1134 = vmul.f32 %v1132, %v1133
    %v1135 = vsub.f32 1.0, %v1134
    %v1136 = vmul.f32 %v1133, %v1135
    %v1137 = vadd.f32 %v1133, %v1136
    %vm1138 = vweird.f32 %v1132
    %vm1139 = vweird.f32 %v1133
    %vm1140 = vmor %vm1138, %vm1139
    %v1141 = vsel %vm1140, %v1133, %v1137
    %v1142 = vand.u32 2147483647, %v1132
    %vm1143 = vcmp.eq.f32.partialorder %v1142, 8.507059e+37
    %v1144 = vand.u32 %v1132, 2147483648
    %v1145 = vor.u32 1.1754944e-38, %v1144
    %v1146 = vsel %vm1143, %v1145, %v1141
    %v1147 = vmul.f32 1.0, %v1146
    %v1148 = vmul.f32 %v1147, %v259
    %v1149 = vsub.f32 %v1148, %v260
    %v1150 = vmul.f32 %v1149, %v1023
    %1152 = vrot.lane.b32.xlu0 %v1149, 64
    %v1153 = vpop.permute.xlu0 %1152
    %v1155 = vmul.f32 %v1149, %v1153
    %1157 = vrot.lane.b32.xlu0 %v1155, 32
    %v1158 = vpop.permute.xlu0 %1157
    %v1160 = vadd.f32 %v1150, %v1158
    %v1161 = vtanh.pop %v1160
    %1163 = vrot.lane.b32.xlu0 %v1161, 64
    %v1164 = vpop.permute.xlu0 %1163
    %v1166 = vmul.f32 %v1149, %v1164
    %1168 = vrot.lane.b32.xlu0 %v1166, 32
    %v1169 = vpop.permute.xlu0 %1168
    %1171 = vrot.lane.b32.xlu0 %v1120, 64
    %v1172 = vpop.permute.xlu0 %1171
    %v1174 = vsel %vm271, %v1169, %v1172
    %v1176 = vsel %vm162, %v1174, 0
    %1178 = vmatpush.msra.mxu0 0.0
    %1179 = vmatpush.msra.mxu0 0.0
    %1180 = vmatpush.msra.mxu0 0.0
    %1181 = vmatpush.msra.mxu0 0.0
    %1182 = vmatpush.msra.mxu0 0.0
    %1183 = vmatpush.msra.mxu0 0.0
    %1184 = vmatpush.msra.mxu0 0.0
    %1185 = vmatpush.msra.mxu0 0.0
    %1186 = vmatpush.msra.mxu0 %v250
    %1187 = vmatpush.msra.mxu0 %v248
    %1188 = vmatpush.msra.mxu0 %v246
    %1189 = vmatpush.msra.mxu0 %v244
    %1190 = vmatpush.msra.mxu0 %v242
    %1191 = vmatpush.msra.mxu0 %v240
    %1192 = vmatpush.msra.mxu0 %v238
    %1193 = vmatpush.msra.mxu0 %v236
    %1194 = vmatmul.f32.gmra.mxu0 %v1176
    %v1195 = vpop.f32.mrf.mxu0
    %v1196 = vadd.f32 0.0, %v1195
    %1197 = vdwg.mxu0
    %1198 = vmatpush.msra.mxu0 0.0
    %1199 = vmatpush.msra.mxu0 0.0
    %1200 = vmatpush.msra.mxu0 0.0
    %1201 = vmatpush.msra.mxu0 0.0
    %1202 = vmatpush.msra.mxu0 0.0
    %1203 = vmatpush.msra.mxu0 0.0
    %1204 = vmatpush.msra.mxu0 0.0
    %1205 = vmatpush.msra.mxu0 0.0
    %1206 = vmatpush.msra.mxu0 %v251
    %1207 = vmatpush.msra.mxu0 %v249
    %1208 = vmatpush.msra.mxu0 %v247
    %1209 = vmatpush.msra.mxu0 %v245
    %1210 = vmatpush.msra.mxu0 %v243
    %1211 = vmatpush.msra.mxu0 %v241
    %1212 = vmatpush.msra.mxu0 %v239
    %1213 = vmatpush.msra.mxu0 %v237
    %1214 = vmatmul.f32.gmra.mxu0 %v1176
    %v1215 = vpop.f32.mrf.mxu0
    %v1216 = vadd.f32 0.0, %v1215
    %1217 = vdwg.mxu0
    %v1218 = vadd.f32 %v1196, %v254
    %v1219 = vmul.f32 %v1218, %v259
    %v1220 = vxor.u32 %v1219, 2147483648
    %v1221 = vmul.f32 %v1220, 1.442695
    %v1222 = vpow.pop %v1221
    %v1223 = vadd.f32 %v1222, 1.0
    %v1224 = vrcp.pop %v1223
    %v1225 = vmul.f32 %v1223, %v1224
    %v1226 = vsub.f32 1.0, %v1225
    %v1227 = vmul.f32 %v1224, %v1226
    %v1228 = vadd.f32 %v1224, %v1227
    %vm1229 = vweird.f32 %v1223
    %vm1230 = vweird.f32 %v1224
    %vm1231 = vmor %vm1229, %vm1230
    %v1232 = vsel %vm1231, %v1224, %v1228
    %v1233 = vand.u32 2147483647, %v1223
    %vm1234 = vcmp.eq.f32.partialorder %v1233, 8.507059e+37
    %v1235 = vand.u32 %v1223, 2147483648
    %v1236 = vor.u32 1.1754944e-38, %v1235
    %v1237 = vsel %vm1234, %v1236, %v1232
    %v1238 = vmul.f32 1.0, %v1237
    %v1239 = vmul.f32 %v1238, %v259
    %v1240 = vsub.f32 %v1239, %v260
    %v1241 = vmul.f32 %v1240, %v1114
    %1243 = vrot.lane.b32.xlu0 %v1240, 64
    %v1244 = vpop.permute.xlu0 %1243
    %v1246 = vmul.f32 %v1240, %v1244
    %1248 = vrot.lane.b32.xlu0 %v1246, 32
    %v1249 = vpop.permute.xlu0 %1248
    %v1251 = vadd.f32 %v1241, %v1249
    %v1252 = vtanh.pop %v1251
    %1254 = vrot.lane.b32.xlu0 %v1252, 64
    %v1255 = vpop.permute.xlu0 %1254
    %v1257 = vmul.f32 %v1240, %v1255
    %1259 = vrot.lane.b32.xlu0 %v1257, 32
    %v1260 = vpop.permute.xlu0 %1259
    %1262 = vst.msk [vmem:[#allocation3 + $0x30] sm:$0xff] %vm271, %v1260
    %v1263 = vld [vmem:[#allocation2 + $0x38] sm:$0xff]
    %v1264 = vadd.f32 %v1263, %v1216
    %v1265 = vmul.f32 %v1264, %v259
    %v1266 = vxor.u32 %v1265, 2147483648
    %v1267 = vmul.f32 %v1266, 1.442695
    %v1268 = vpow.pop %v1267
    %v1269 = vadd.f32 %v1268, 1.0
    %v1270 = vrcp.pop %v1269
    %v1271 = vmul.f32 %v1269, %v1270
    %v1272 = vsub.f32 1.0, %v1271
    %v1273 = vmul.f32 %v1270, %v1272
    %v1274 = vadd.f32 %v1270, %v1273
    %vm1275 = vweird.f32 %v1269
    %vm1276 = vweird.f32 %v1270
    %vm1277 = vmor %vm1275, %vm1276
    %v1278 = vsel %vm1277, %v1270, %v1274
    %v1279 = vand.u32 2147483647, %v1269
    %vm1280 = vcmp.eq.f32.partialorder %v1279, 8.507059e+37
    %v1281 = vand.u32 %v1269, 2147483648
    %v1282 = vor.u32 1.1754944e-38, %v1281
    %v1283 = vsel %vm1280, %v1282, %v1278
    %v1284 = vmul.f32 1.0, %v1283
    %v1285 = vmul.f32 %v1284, %v259
    %v1286 = vsub.f32 %v1285, %v260
    %v1287 = vmul.f32 %v1286, %v1160
    %1289 = vrot.lane.b32.xlu0 %v1286, 64
    %v1290 = vpop.permute.xlu0 %1289
    %v1292 = vmul.f32 %v1286, %v1290
    %1294 = vrot.lane.b32.xlu0 %v1292, 32
    %v1295 = vpop.permute.xlu0 %1294
    %v1297 = vadd.f32 %v1287, %v1295
    %v1298 = vtanh.pop %v1297
    %1300 = vrot.lane.b32.xlu0 %v1298, 64
    %v1301 = vpop.permute.xlu0 %1300
    %v1303 = vmul.f32 %v1286, %v1301
    %1305 = vrot.lane.b32.xlu0 %v1303, 32
    %v1306 = vpop.permute.xlu0 %1305
    %1308 = vrot.lane.b32.xlu0 %v1257, 64
    %v1309 = vpop.permute.xlu0 %1308
    %v1311 = vsel %vm271, %v1306, %v1309
    %v1313 = vsel %vm162, %v1311, 0
    %1315 = vmatpush.msra.mxu0 0.0
    %1316 = vmatpush.msra.mxu0 0.0
    %1317 = vmatpush.msra.mxu0 0.0
    %1318 = vmatpush.msra.mxu0 0.0
    %1319 = vmatpush.msra.mxu0 0.0
    %1320 = vmatpush.msra.mxu0 0.0
    %1321 = vmatpush.msra.mxu0 0.0
    %1322 = vmatpush.msra.mxu0 0.0
    %1323 = vmatpush.msra.mxu0 %v250
    %1324 = vmatpush.msra.mxu0 %v248
    %1325 = vmatpush.msra.mxu0 %v246
    %1326 = vmatpush.msra.mxu0 %v244
    %1327 = vmatpush.msra.mxu0 %v242
    %1328 = vmatpush.msra.mxu0 %v240
    %1329 = vmatpush.msra.mxu0 %v238
    %1330 = vmatpush.msra.mxu0 %v236
    %1331 = vmatmul.f32.gmra.mxu0 %v1313
    %v1332 = vpop.f32.mrf.mxu0
    %v1333 = vadd.f32 0.0, %v1332
    %1334 = vdwg.mxu0
    %v1335 = vadd.f32 %v1333, %v254
    %v1336 = vmul.f32 %v1335, %v259
    %v1337 = vxor.u32 %v1336, 2147483648
    %v1338 = vmul.f32 %v1337, 1.442695
    %v1339 = vpow.pop %v1338
    %v1340 = vadd.f32 %v1339, 1.0
    %v1341 = vrcp.pop %v1340
    %v1342 = vmul.f32 %v1340, %v1341
    %v1343 = vsub.f32 1.0, %v1342
    %v1344 = vmul.f32 %v1341, %v1343
    %v1345 = vadd.f32 %v1341, %v1344
    %vm1346 = vweird.f32 %v1340
    %vm1347 = vweird.f32 %v1341
    %vm1348 = vmor %vm1346, %vm1347
    %v1349 = vsel %vm1348, %v1341, %v1345
    %v1350 = vand.u32 2147483647, %v1340
    %vm1351 = vcmp.eq.f32.partialorder %v1350, 8.507059e+37
    %v1352 = vand.u32 %v1340, 2147483648
    %v1353 = vor.u32 1.1754944e-38, %v1352
    %v1354 = vsel %vm1351, %v1353, %v1349
    %v1355 = vmul.f32 1.0, %v1354
    %v1356 = vmul.f32 %v1355, %v259
    %v1357 = vsub.f32 %v1356, %v260
    %v1358 = vmul.f32 %v1357, %v1251
    %1360 = vrot.lane.b32.xlu0 %v1357, 64
    %v1361 = vpop.permute.xlu0 %1360
    %v1363 = vmul.f32 %v1357, %v1361
    %1365 = vrot.lane.b32.xlu0 %v1363, 32
    %v1366 = vpop.permute.xlu0 %1365
    %v1368 = vadd.f32 %v1358, %v1366
    %v1369 = vtanh.pop %v1368
    %1371 = vrot.lane.b32.xlu0 %v1369, 64
    %v1372 = vpop.permute.xlu0 %1371
    %v1374 = vmul.f32 %v1357, %v1372
    %1376 = vrot.lane.b32.xlu0 %v1374, 32
    %v1377 = vpop.permute.xlu0 %1376
    %1379 = vst.msk [vmem:[#allocation3 + $0x38] sm:$0xff] %vm271, %v1377
    %1380 = vst.msk [vmem:[#allocation13] sm:$0xff] %vm271, %v1306
    %s1381 = scalar_lea.vmem [#allocation13], 8
    %1382 = vst.msk [vmem:[%s1381] sm:$0xff] %vm271, %v1377
    %1384 = vrot.lane.b32.xlu0 %v1297, 96
    %v1385 = vpop.permute.xlu0 %1384
    %1387 = vst.msk [vmem:[#allocation15] sm:$0xff] %vm271, %v1385
    %1389 = vrot.lane.b32.xlu0 %v1368, 96
    %v1390 = vpop.permute.xlu0 %1389
    %s1392 = scalar_lea.vmem [#allocation15], 8
    %1393 = vst.msk [vmem:[%s1392] sm:$0xff] %vm271, %v1390
    %v1394 = vld [vmem:[#allocation3] sm:$0xff]
    %v1395 = vld [vmem:[#allocation3 + $0x8] sm:$0xff]
    %v1396 = vld [vmem:[#allocation3 + $0x10] sm:$0xff]
    %v1397 = vld [vmem:[#allocation3 + $0x18] sm:$0xff]
    %v1398 = vld [vmem:[#allocation3 + $0x20] sm:$0xff]
    %v1399 = vld [vmem:[#allocation3 + $0x28] sm:$0xff]
    %v1400 = vld [vmem:[#allocation3 + $0x30] sm:$0xff]
    %v1401 = vld [vmem:[#allocation3 + $0x38] sm:$0xff]
    %v1402 = vld [vmem:[#allocation7] sm:$0xff]
    %v1403 = vld [vmem:[#allocation7 + $0x8] sm:$0xff]
    %v1404 = vld [vmem:[#allocation7 + $0x10] sm:$0xff]
    %v1405 = vld [vmem:[#allocation7 + $0x18] sm:$0xff]
    %v1406 = vld [vmem:[%s6] sm:$0x1]
    %v1408 = vperm.slane %v1406, 0
    %v1411 = vsel %vm271, %v1394, 0
    %v1414 = vsel %vm271, %v1395, 0
    %v1417 = vsel %vm271, %v1396, 0
    %v1420 = vsel %vm271, %v1397, 0
    %v1423 = vsel %vm271, %v1398, 0
    %v1426 = vsel %vm271, %v1399, 0
    %v1429 = vsel %vm271, %v1400, 0
    %v1432 = vsel %vm271, %v1401, 0
    %1434 = vmatpush.msra.mxu0 0.0
    %1435 = vmatpush.msra.mxu0 0.0
    %1436 = vmatpush.msra.mxu0 0.0
    %1437 = vmatpush.msra.mxu0 0.0
    %1438 = vmatpush.msra.mxu0 0.0
    %1439 = vmatpush.msra.mxu0 0.0
    %1440 = vmatpush.msra.mxu0 0.0
    %1441 = vmatpush.msra.mxu0 0.0
    %1442 = vmatpush.msra.mxu0 0.0
    %1443 = vmatpush.msra.mxu0 0.0
    %1444 = vmatpush.msra.mxu0 0.0
    %1445 = vmatpush.msra.mxu0 0.0
    %1446 = vmatpush.msra.mxu0 %v1405
    %1447 = vmatpush.msra.mxu0 %v1404
    %1448 = vmatpush.msra.mxu0 %v1403
    %1449 = vmatpush.msra.mxu0 %v1402
    %1450 = vmatmul.f32.gmra.mxu0 %v1411
    %v1451 = vpop.f32.mrf.mxu0
    %v1452 = vadd.f32 %v1408, %v1451
    %1453 = vmatmul.f32.gmra.mxu0 %v1414
    %v1454 = vpop.f32.mrf.mxu0
    %v1455 = vadd.f32 %v1408, %v1454
    %1456 = vmatmul.f32.gmra.mxu0 %v1417
    %v1457 = vpop.f32.mrf.mxu0
    %v1458 = vadd.f32 %v1408, %v1457
    %1459 = vmatmul.f32.gmra.mxu0 %v1420
    %v1460 = vpop.f32.mrf.mxu0
    %v1461 = vadd.f32 %v1408, %v1460
    %1462 = vmatmul.f32.gmra.mxu0 %v1423
    %v1463 = vpop.f32.mrf.mxu0
    %v1464 = vadd.f32 %v1408, %v1463
    %1465 = vmatmul.f32.gmra.mxu0 %v1426
    %v1466 = vpop.f32.mrf.mxu0
    %v1467 = vadd.f32 %v1408, %v1466
    %1468 = vmatmul.f32.gmra.mxu0 %v1429
    %v1469 = vpop.f32.mrf.mxu0
    %v1470 = vadd.f32 %v1408, %v1469
    %1471 = vmatmul.f32.gmra.mxu0 %v1432
    %v1472 = vpop.f32.mrf.mxu0
    %v1473 = vadd.f32 %v1408, %v1472
    %1474 = vdwg.mxu0
    %1475 = vmax.xlane.f32.xlu0 %v1452
    %v1476 = vpop.xlane.xlu0 %1475
    %1477 = vmax.xlane.f32.xlu0 %v1455
    %v1478 = vpop.xlane.xlu0 %1477
    %1479 = vmax.xlane.f32.xlu0 %v1458
    %v1480 = vpop.xlane.xlu0 %1479
    %1481 = vmax.xlane.f32.xlu0 %v1461
    %v1482 = vpop.xlane.xlu0 %1481
    %1483 = vmax.xlane.f32.xlu0 %v1464
    %v1484 = vpop.xlane.xlu0 %1483
    %1485 = vmax.xlane.f32.xlu0 %v1467
    %v1486 = vpop.xlane.xlu0 %1485
    %1487 = vmax.xlane.f32.xlu0 %v1470
    %v1488 = vpop.xlane.xlu0 %1487
    %1489 = vmax.xlane.f32.xlu0 %v1473
    %v1490 = vpop.xlane.xlu0 %1489
    %v1491 = vsub.f32 %v1452, %v1476
    %v1492 = vsub.f32 %v1455, %v1478
    %v1493 = vsub.f32 %v1458, %v1480
    %v1494 = vsub.f32 %v1461, %v1482
    %v1495 = vsub.f32 %v1464, %v1484
    %v1496 = vsub.f32 %v1467, %v1486
    %v1497 = vsub.f32 %v1470, %v1488
    %v1498 = vsub.f32 %v1473, %v1490
    %v1499 = vmul.f32 %v1491, 1.442695
    %v1500 = vpow.pop %v1499
    %v1501 = vmul.f32 %v1492, 1.442695
    %v1502 = vpow.pop %v1501
    %v1503 = vmul.f32 %v1493, 1.442695
    %v1504 = vpow.pop %v1503
    %v1505 = vmul.f32 %v1494, 1.442695
    %v1506 = vpow.pop %v1505
    %v1507 = vmul.f32 %v1495, 1.442695
    %v1508 = vpow.pop %v1507
    %v1509 = vmul.f32 %v1496, 1.442695
    %v1510 = vpow.pop %v1509
    %v1511 = vmul.f32 %v1497, 1.442695
    %v1512 = vpow.pop %v1511
    %v1513 = vmul.f32 %v1498, 1.442695
    %v1514 = vpow.pop %v1513
    %1515 = vadd.xlane.f32.xlu0 %v1500
    %v1516 = vpop.xlane.xlu0 %1515
    %1517 = vadd.xlane.f32.xlu0 %v1502
    %v1518 = vpop.xlane.xlu0 %1517
    %1519 = vadd.xlane.f32.xlu0 %v1504
    %v1520 = vpop.xlane.xlu0 %1519
    %1521 = vadd.xlane.f32.xlu0 %v1506
    %v1522 = vpop.xlane.xlu0 %1521
    %1523 = vadd.xlane.f32.xlu0 %v1508
    %v1524 = vpop.xlane.xlu0 %1523
    %1525 = vadd.xlane.f32.xlu0 %v1510
    %v1526 = vpop.xlane.xlu0 %1525
    %1527 = vadd.xlane.f32.xlu0 %v1512
    %v1528 = vpop.xlane.xlu0 %1527
    %1529 = vadd.xlane.f32.xlu0 %v1514
    %v1530 = vpop.xlane.xlu0 %1529
    %v1531 = vlog2.pop %v1516
    %v1532 = vmul.f32 %v1531, 0.6931472
    %v1533 = vlog2.pop %v1518
    %v1534 = vmul.f32 %v1533, 0.6931472
    %v1535 = vlog2.pop %v1520
    %v1536 = vmul.f32 %v1535, 0.6931472
    %v1537 = vlog2.pop %v1522
    %v1538 = vmul.f32 %v1537, 0.6931472
    %v1539 = vlog2.pop %v1524
    %v1540 = vmul.f32 %v1539, 0.6931472
    %v1541 = vlog2.pop %v1526
    %v1542 = vmul.f32 %v1541, 0.6931472
    %v1543 = vlog2.pop %v1528
    %v1544 = vmul.f32 %v1543, 0.6931472
    %v1545 = vlog2.pop %v1530
    %v1546 = vmul.f32 %v1545, 0.6931472
    %v1547 = vsub.f32 %v1491, %v1532
    %v1548 = vsub.f32 %v1492, %v1534
    %v1549 = vsub.f32 %v1493, %v1536
    %v1550 = vsub.f32 %v1494, %v1538
    %v1551 = vsub.f32 %v1495, %v1540
    %v1552 = vsub.f32 %v1496, %v1542
    %v1553 = vsub.f32 %v1497, %v1544
    %v1554 = vsub.f32 %v1498, %v1546
    %1555 = vst [vmem:[#allocation12] sm:$0xff] %v1547
    %1556 = vst [vmem:[#allocation12 + $0x8] sm:$0xff] %v1548
    %1557 = vst [vmem:[#allocation12 + $0x10] sm:$0xff] %v1549
    %1558 = vst [vmem:[#allocation12 + $0x18] sm:$0xff] %v1550
    %1559 = vst [vmem:[#allocation12 + $0x20] sm:$0xff] %v1551
    %1560 = vst [vmem:[#allocation12 + $0x28] sm:$0xff] %v1552
    %1561 = vst [vmem:[#allocation12 + $0x30] sm:$0xff] %v1553
    %1562 = vst [vmem:[#allocation12 + $0x38] sm:$0xff] %v1554
    // Predicated region
    $region54: #{rnn_model_forward.1} parent=1 // pred_check
      _
    $region55: #{rnn_model_forward.1} parent=1 // pred_check_branch
      %1564 = sbr.rel (0) target = $region57
    $region56: #{rnn_model_forward.1} parent=1 // pred_region
      %1566 = vsyncadd [#allocation6], 0
      %s1567 = sshll.u32 [#allocation12], 4
      %s1568 = int_to_ptr.vmem [resolvable:$true] %s1567
      %s1569 = sshll.u32 %s9, 4
      %s1570 = int_to_ptr.hbm [resolvable:$true] %s1569
      %1575 = dma.vmem_to_hbm [thread:$0]  %s1568, 1024, %s1570, [#allocation6], 128, 128, 8
    $region57: #{rnn_model_forward.1} parent=1 // pred_fallthru
      _
    // Predicated region
    $region58: #{rnn_model_forward.1} parent=1 // pred_check
      _
    $region59: #{rnn_model_forward.1} parent=1 // pred_check_branch
      %1577 = sbr.rel (0) target = $region61
    $region60: #{rnn_model_forward.1} parent=1 // pred_region
      %1579 = vsyncadd [#allocation14], 0
      %s1580 = sshll.u32 [#allocation13], 4
      %s1581 = int_to_ptr.vmem [resolvable:$true] %s1580
      %s1582 = sshll.u32 %s10, 4
      %s1583 = int_to_ptr.hbm [resolvable:$true] %s1582
      %1588 = dma.vmem_to_hbm [thread:$0]  %s1581, 256, %s1583, [#allocation14], 128, 128, 8
    $region61: #{rnn_model_forward.1} parent=1 // pred_fallthru
      _
    // Predicated region
    $region62: #{rnn_model_forward.1} parent=1 // pred_check
      _
    $region63: #{rnn_model_forward.1} parent=1 // pred_check_branch
      %1590 = sbr.rel (0) target = $region65
    $region64: #{rnn_model_forward.1} parent=1 // pred_region
      %1592 = vsyncadd [#allocation14], 0
      %s1593 = sshll.u32 [#allocation15], 4
      %s1594 = int_to_ptr.vmem [resolvable:$true] %s1593
      %s1595 = sshll.u32 %s11, 4
      %s1596 = int_to_ptr.hbm [resolvable:$true] %s1595
      %1601 = dma.vmem_to_hbm [thread:$0]  %s1594, 256, %s1596, [#allocation14], 128, 128, 8
    $region65: #{rnn_model_forward.1} parent=1 // pred_fallthru
      _
    // Predicated region
    $region66: #{rnn_model_forward.1} parent=1 // pred_check
      _
    $region67: #{rnn_model_forward.1} parent=1 // pred_check_branch
      %1603 = sbr.rel (0) target = $region69
    $region68: #{rnn_model_forward.1} parent=1 // pred_region
      %1605 = dma.done [#allocation6], 1024
    $region69: #{rnn_model_forward.1} parent=1 // pred_fallthru
      _
    // Predicated region
    $region70: #{rnn_model_forward.1} parent=1 // pred_check
      _
    $region71: #{rnn_model_forward.1} parent=1 // pred_check_branch
      %1607 = sbr.rel (0) target = $region73
    $region72: #{rnn_model_forward.1} parent=1 // pred_region
      %1609 = dma.done [#allocation14], 256
    $region73: #{rnn_model_forward.1} parent=1 // pred_fallthru
      _
    // Predicated region
    $region74: #{rnn_model_forward.1} parent=1 // pred_check
      _
    $region75: #{rnn_model_forward.1} parent=1 // pred_check_branch
      %1611 = sbr.rel (0) target = $region77
    $region76: #{rnn_model_forward.1} parent=1 // pred_region
      %1613 = dma.done [#allocation14], 256
    $region77: #{rnn_model_forward.1} parent=1 // pred_fallthru
      _
    %1614 = vsyncpa [#allocation5], 1
    %1615 = vsyncpa [#allocation8], 1
    %1616 = vsyncpa [#allocation11], 1
    %1617 = vsyncpa [#allocation6], 1
    %1618 = vsyncpa [#allocation14], 1

</llo_original>
